<compile_context>
chip_gen: v6e
topology: v6e:2x2x1
jax: 0.10.0
libtpu: 0.0.40
codegen_flags: <defaults>
</compile_context>

<pallas_src>
import functools

import numpy as np
import jax
import jax.numpy as jnp
from jax.experimental import pallas as pl
from jax.experimental.pallas import tpu as pltpu


S2D_FACTORS = (4, 2, 2)          # synthetic backbone strides (4, 8, 16)
POOL_K = 4                       # nn.AvgPool2d(kernel_size=4, stride=4)
COMPUTE_DTYPE = jnp.bfloat16     # activations / weights; accumulation is f32


def _vmem_limit_bytes():
    """Generation-aware scoped-VMEM limit (v5e/v6e: 128 MiB, v7x: 64 MiB)."""
    try:
        cap = getattr(pltpu.get_tpu_info(), "vmem_capacity_bytes", None)
    except Exception:  # noqa: BLE001 - fall back to a universally safe value
        cap = None
    if not cap:
        return 32 * 1024 * 1024
    return int(min(cap * 3 // 4, 96 * 1024 * 1024))


VMEM_LIMIT_BYTES = _vmem_limit_bytes()


def _resident(shape):
    """BlockSpec for an operand whose block never changes across the grid:
    single-buffered so it does not waste VMEM on a useless second copy."""
    nd = len(shape)
    idx = lambda *_: (0,) * nd  # noqa: E731
    try:
        return pl.BlockSpec(shape, idx, pipeline_mode=pl.Buffered(1))
    except Exception:  # noqa: BLE001 - older BlockSpec without pipeline_mode
        return pl.BlockSpec(shape, idx)


# ------------------------------ Pallas kernels -------------------------------

def _matmul_bias_kernel(x_ref, w_ref, b_ref, o_ref, *, relu):
    """One (TM, Cin) @ (Cin, Cout) tile of a 1x1 conv (+ bias, optional ReLU)."""
    acc = jnp.dot(x_ref[...], w_ref[...], preferred_element_type=jnp.float32)
    acc = acc + b_ref[...].astype(jnp.float32)
    if relu:
        acc = jnp.maximum(acc, 0.0)
    o_ref[...] = acc.astype(o_ref.dtype)


def _make_multi_reduce_kernel(num_levels):
    """Per grid step (one image): for each pyramid level i,
         out_i = M_i @ x_i
    a plain 2-D MXU matmul contracting the leading axis (the H or W axis of
    that level).  No in-kernel reshape / transpose."""
    def kernel(*refs):
        xs = refs[:num_levels]
        ms = refs[num_levels:2 * num_levels]
        outs = refs[2 * num_levels:]
        for x_ref, m_ref, o_ref in zip(xs, ms, outs):
            o_ref[0] = jnp.dot(
                m_ref[...], x_ref[0],
                preferred_element_type=jnp.float32).astype(o_ref.dtype)
    return kernel


# ------------------------------ kernel wrappers -------------------------------

def _choose_tile_m(m, cin, cout, in_bytes, out_bytes, budget_bytes, tm_cap=16384):
    """Largest M-tile whose double-buffered in/out tiles fit the VMEM budget."""
    per_row = 2 * cin * in_bytes + 2 * cout * out_bytes
    tm = min(m, tm_cap, max(8, budget_bytes // max(per_row, 1)))
    if tm >= m:
        return m
    return max(8, (tm // 8) * 8)


def matmul_bias(x_flat, w, b, *, relu=False, out_dtype=None):
    """(M, Cin) @ (Cin, Cout) + bias (+ ReLU) as an M-tiled Pallas matmul.

    Weights / bias are resident (single-buffered); activation rows stream
    through double-buffered M tiles; the M grid axis is 'parallel'."""
    m, cin = x_flat.shape
    cout = w.shape[1]
    out_dtype = out_dtype or x_flat.dtype
    b2 = b.reshape(1, cout).astype(jnp.float32)
    tm = _choose_tile_m(m, cin, cout,
                        jnp.dtype(x_flat.dtype).itemsize,
                        jnp.dtype(out_dtype).itemsize,
                        VMEM_LIMIT_BYTES // 2)
    return pl.pallas_call(
        functools.partial(_matmul_bias_kernel, relu=relu),
        out_shape=jax.ShapeDtypeStruct((m, cout), out_dtype),
        grid=(pl.cdiv(m, tm),),
        in_specs=[
            pl.BlockSpec((tm, cin), lambda i: (i, 0)),   # streaming activations
            _resident((cin, cout)),                      # weights
            _resident((1, cout)),                        # bias
        ],
        out_specs=pl.BlockSpec((tm, cout), lambda i: (i, 0)),
        compiler_params=pltpu.CompilerParams(
            dimension_semantics=("parallel",),
            vmem_limit_bytes=VMEM_LIMIT_BYTES,
        ),
    )(x_flat, w, b2)


def pointwise_conv_nhwc(x_nhwc, w, b, *, relu=False, out_dtype=None):
    """1x1 conv over NHWC: flatten to (N*H*W, Cin) (pure reshape) and matmul."""
    n, h, wd, c = x_nhwc.shape
    cout = w.shape[1]
    y = matmul_bias(x_nhwc.reshape(n * h * wd, c), w, b,
                    relu=relu, out_dtype=out_dtype)
    return y.reshape(n, h, wd, cout)


def batched_leading_reduce(xs, mats, out_dtype=COMPUTE_DTYPE):
    """For every pyramid level i: out_i[n] = mats_i @ xs_i[n].

    xs_i: (N, R_i, L_i), mats_i: (Rout, R_i) -> (N, Rout, L_i).  One
    pallas_call covers all levels; grid runs over images; the reduction
    matrices are tiny and resident (single-buffered)."""
    n = xs[0].shape[0]
    num_levels = len(xs)
    in_specs = (
        [pl.BlockSpec((1,) + x.shape[1:], lambda i: (i, 0, 0)) for x in xs]
        + [_resident(m.shape) for m in mats]
    )
    out_shape = tuple(
        jax.ShapeDtypeStruct((n, m.shape[0], x.shape[2]), out_dtype)
        for x, m in zip(xs, mats))
    out_specs = tuple(
        pl.BlockSpec((1, m.shape[0], x.shape[2]), lambda i: (i, 0, 0))
        for x, m in zip(xs, mats))
    return pl.pallas_call(
        _make_multi_reduce_kernel(num_levels),
        out_shape=out_shape,
        grid=(n,),
        in_specs=in_specs,
        out_specs=out_specs,
        compiler_params=pltpu.CompilerParams(
            dimension_semantics=("parallel",),
            vmem_limit_bytes=VMEM_LIMIT_BYTES,
        ),
    )(*xs, *mats)


# --------------------------- transform matrices (host) ------------------------

def bilinear_matrix_np(out_size, in_size):
    """1-D matrix matching F.interpolate(mode='bilinear', align_corners=False)
    along one axis (upsampling / identity cases, antialias=False)."""
    m = np.zeros((out_size, in_size), np.float32)
    scale = in_size / out_size
    for o in range(out_size):
        src = max((o + 0.5) * scale - 0.5, 0.0)   # PyTorch clamps negative src
        i0 = min(int(np.floor(src)), in_size - 1)
        i1 = min(i0 + 1, in_size - 1)
        frac = src - i0
        m[o, i0] += 1.0 - frac
        m[o, i1] += frac
    return m


def avgpool_matrix_np(in_size, k):
    """1-D AvgPool(kernel=k, stride=k) matrix; trailing remainder is dropped,
    matching nn.AvgPool2d's floor behaviour."""
    out_size = in_size // k
    m = np.zeros((out_size, in_size), np.float32)
    for o in range(out_size):
        m[o, o * k:(o + 1) * k] = 1.0 / k
    return m


def build_separable_pool_resize(final_hw, feat_hws, pool_k=POOL_K):
    """Separable 1-D factors of (AvgPool2d(pool_k) ∘ bilinear-resize-to-final):
    mh_i: (Hp, H_i), mw_i: (Wp, W_i).  No dense Kronecker matrices."""
    fh, fw = final_hw
    ah = avgpool_matrix_np(fh, pool_k)
    aw = avgpool_matrix_np(fw, pool_k)
    mhs, mws = [], []
    for (h, w) in feat_hws:                      # level 0: bilinear == identity
        mhs.append(jnp.asarray(ah @ bilinear_matrix_np(fh, h), dtype=COMPUTE_DTYPE))
        mws.append(jnp.asarray(aw @ bilinear_matrix_np(fw, w), dtype=COMPUTE_DTYPE))
    return mhs, mws, (fh // pool_k, fw // pool_k)


# --------------------------------- add=True head ------------------------------

def add_branch_head(feats_nhwc, conv_params):
    """channel_convs -> bilinear resize to feats[0] size -> sum -> AvgPool2d(4,4).

    Computed as: separable (pool∘resize) per level (two Pallas reduce passes
    with a tiny XLA transpose in between), then a single fused channel
    projection + level sum over the concatenation of all reduced levels.
    Exact reordering: the 1x1 conv commutes with per-channel spatial linear
    ops, and the resize/pool rows sum to 1 so the biases simply add."""
    n = feats_nhwc[0].shape[0]
    fh, fw = feats_nhwc[0].shape[1], feats_nhwc[0].shape[2]
    feat_hws = [(f.shape[1], f.shape[2]) for f in feats_nhwc]
    mhs, mws, (hp, wp) = build_separable_pool_resize((fh, fw), feat_hws)

    # 1) H-reduction:  (N, H_i, W_i*C_i) -> (N, Hp, W_i*C_i)       [Pallas]
    xs = [f.reshape(n, f.shape[1], f.shape[2] * f.shape[3]) for f in feats_nhwc]
    ts = batched_leading_reduce(xs, mhs)

    # 2) bring W to the front on the 4x-smaller intermediate (cheap XLA
    #    transpose), then W-reduction: (N, W_i, Hp*C_i) -> (N, Wp, Hp*C_i)
    tts = []
    for t, f in zip(ts, feats_nhwc):
        w_i, c_i = f.shape[2], f.shape[3]
        tts.append(t.reshape(n, hp, w_i, c_i)
                    .transpose(0, 2, 1, 3)
                    .reshape(n, w_i, hp * c_i))
    us = batched_leading_reduce(tts, mws)

    # 3) one fused channel projection + level sum over M = N*Wp*Hp rows
    zs = [u.reshape(n * wp * hp, f.shape[3]) for u, f in zip(us, feats_nhwc)]
    z = jnp.concatenate(zs, axis=-1)                                 # (M, sum C_i)
    w_cat = jnp.concatenate([wb[0] for wb in conv_params],
                            axis=0).astype(COMPUTE_DTYPE)            # (sum C_i, C0)
    b_sum = sum(wb[1] for wb in conv_params).astype(jnp.float32)     # (C0,)
    c0 = conv_params[0][0].shape[1]
    out = matmul_bias(z, w_cat, b_sum, relu=False, out_dtype=jnp.float32)
    # rows are ordered (n, q, p); reshape and emit NCHW = (n, c0, p, q)
    return out.reshape(n, wp, hp, c0).transpose(0, 3, 2, 1)


# ------------------------------- synthetic model ------------------------------

def _space_to_depth_nhwc(x, r):
    n, h, w, c = x.shape
    x = x.reshape(n, h // r, r, w // r, r, c)
    x = jnp.transpose(x, (0, 1, 3, 2, 4, 5))
    return x.reshape(n, h // r, w // r, r * r * c)


def init_params(key, in_ch=4, widths=(16, 32, 64)):
    ks = jax.random.split(key, 4 * len(widths))
    p = {"backbone": [], "channel_convs": []}
    cin = in_ch
    for i, (cout, r) in enumerate(zip(widths, S2D_FACTORS)):
        cin_eff = cin * r * r
        w = jax.random.normal(ks[2 * i], (cin_eff, cout), jnp.float32) / np.sqrt(cin_eff)
        b = 0.05 * jax.random.normal(ks[2 * i + 1], (cout,), jnp.float32)
        p["backbone"].append((w, b))
        cin = cout
    c0 = widths[0]
    off = 2 * len(widths)
    # channel_convs{i}: ConvLayer(width_list[i] -> width_list[0], k=1, act=None),
    # BN folded into (w, b).
    for i, cw in enumerate(widths):
        w = jax.random.normal(ks[off + 2 * i], (cw, c0), jnp.float32) / np.sqrt(cw)
        b = 0.05 * jax.random.normal(ks[off + 2 * i + 1], (c0,), jnp.float32)
        p["channel_convs"].append((w, b))
    return p


def backbone_forward_nhwc(x_nhwc, backbone_params):
    """Reduced multi-scale pyramid standing in for efficientvit_backbone_l*."""
    # TODO(synk): real backbone (MBConv + linear attention, torch.load weights)
    # not reproducible here; space-to-depth + 1x1 conv stages stand in.
    # TODO(synk): the space-to-depth rearrangement stays in XLA; fusing it into
    # the conv BlockSpec needs an in-kernel leading-dim permute that Mosaic may
    # not lower, so it is left outside the Pallas call.
    feats = []
    h = x_nhwc.astype(COMPUTE_DTYPE)
    for (w, b), r in zip(backbone_params, S2D_FACTORS):
        h = _space_to_depth_nhwc(h, r)
        h = pointwise_conv_nhwc(h, w.astype(COMPUTE_DTYPE), b,
                                relu=True, out_dtype=COMPUTE_DTYPE)
        feats.append(h)
    return feats


@jax.jit
def efficientvit_forward(x_nchw, params):
    """EfficientViT.forward with add=True (NCHW only at the model boundary)."""
    x = jnp.transpose(x_nchw, (0, 2, 3, 1))                 # -> NHWC once
    feats = backbone_forward_nhwc(x, params["backbone"])
    pooled = add_branch_head(feats, params["channel_convs"])
    outs = [jnp.transpose(f, (0, 3, 1, 2)).astype(jnp.float32) for f in feats]
    outs[-1] = pooled.astype(jnp.float32)                   # output[-1] replaced
    return outs


# ------------------------------ plain-jnp reference ---------------------------

def _reference_forward(x_nchw, params):
    """Unfused pure-f32 reference (conv -> interpolate -> sum -> avgpool)."""
    x = jnp.transpose(x_nchw, (0, 2, 3, 1))
    feats = []
    h = x
    for (w, b), r in zip(params["backbone"], S2D_FACTORS):
        h = _space_to_depth_nhwc(h, r)
        h = jnp.maximum(jnp.einsum('nhwc,cd->nhwd', h, w) + b, 0.0)
        feats.append(h)
    fh, fw = feats[0].shape[1], feats[0].shape[2]
    acc = None
    for (w, b), f in zip(params["channel_convs"], feats):
        y = jnp.einsum('nhwc,cd->nhwd', f, w) + b
        if acc is None:
            acc = y
        else:
            rh = jnp.asarray(bilinear_matrix_np(fh, y.shape[1]))
            rw = jnp.asarray(bilinear_matrix_np(fw, y.shape[2]))
            acc = acc + jnp.einsum('oh,nhwc,pw->nopc', rh, y, rw)
    ah = jnp.asarray(avgpool_matrix_np(fh, POOL_K))
    aw = jnp.asarray(avgpool_matrix_np(fw, POOL_K))
    pooled = jnp.einsum('oh,nhwc,pw->nopc', ah, acc, aw)
    outs = [jnp.transpose(f, (0, 3, 1, 2)) for f in feats]
    outs[-1] = jnp.transpose(pooled, (0, 3, 1, 2))
    return outs


# ------------------------------------- main -----------------------------------

if __name__ == "__main__":
    key = jax.random.PRNGKey(0)
    k_x, k_p = jax.random.split(key)
    # small synthetic input: N=2, C=4, H=W=32 -> pyramid at 8x8 / 4x4 / 2x2,
    # final_stage_fea after AvgPool2d(4,4) at 2x2.
    x = jax.random.normal(k_x, (2, 4, 32, 32), jnp.float32)
    params = init_params(k_p, in_ch=4, widths=(16, 32, 64))

    outs = efficientvit_forward(x, params)
    outs = [jax.block_until_ready(o) for o in outs]

    # shapes: raw backbone features + replaced output[-1]
    assert outs[0].shape == (2, 16, 8, 8)
    assert outs[1].shape == (2, 32, 4, 4)
    assert outs[-1].shape == (2, 16, 2, 2)

    # numerical check against the unfused f32 reference (Pallas path uses bf16
    # activations/weights with f32 accumulation, hence the tolerance).
    refs = _reference_forward(x, params)
    for o, r in zip(outs, refs):
        np.testing.assert_allclose(np.asarray(o, dtype=np.float32),
                                   np.asarray(r, dtype=np.float32),
                                   rtol=3e-2, atol=3e-2)

    print("KERNEL_OK")
</pallas_src>

<mosaic_0001>
module attributes {stable_mosaic.version = 11 : i64} {
  func.func @_matmul_bias_kernel(%arg0: i32, %arg1: memref<128x64xbf16, #tpu.memory_space<vmem>>, %arg2: memref<64x16xbf16, #tpu.memory_space<vmem>>, %arg3: memref<1x16xf32, #tpu.memory_space<vmem>>, %arg4: memref<128x16xbf16, #tpu.memory_space<vmem>>) attributes {dimension_semantics = [#tpu.dimension_semantics<parallel>], iteration_bounds = array<i64: 1>, scalar_prefetch = 0 : i64, scratch_operands = 0 : i64, tpu.core_type = #tpu.core_type<tc>, window_params = [{transform_indices = @transform_0, window_bounds = array<i64: 128, 64>}, {pipeline_mode = #tpu.pipeline_mode<synchronous>, transform_indices = @transform_1, window_bounds = array<i64: 64, 16>}, {pipeline_mode = #tpu.pipeline_mode<synchronous>, transform_indices = @transform_2, window_bounds = array<i64: 1, 16>}, {transform_indices = @transform_3, window_bounds = array<i64: 128, 16>}]} {
    %c0 = arith.constant 0 : index
    %c0_0 = arith.constant 0 : index
    %0 = vector.load %arg1[%c0, %c0_0] : memref<128x64xbf16, #tpu.memory_space<vmem>>, vector<128x64xbf16>
    %c0_1 = arith.constant 0 : index
    %c0_2 = arith.constant 0 : index
    %1 = vector.load %arg2[%c0_1, %c0_2] : memref<64x16xbf16, #tpu.memory_space<vmem>>, vector<64x16xbf16>
    %cst = arith.constant dense<0.000000e+00> : vector<128x16xf32>
    %2 = tpu.matmul %0, %1, %cst {dimension_numbers = #tpu.dot_dimension_numbers<[1], [0], [0], [1], [0, 0, 1, 1], [], []>} : vector<128x64xbf16>, vector<64x16xbf16>, vector<128x16xf32> -> vector<128x16xf32>
    %c0_3 = arith.constant 0 : index
    %c0_4 = arith.constant 0 : index
    %3 = vector.load %arg3[%c0_3, %c0_4] : memref<1x16xf32, #tpu.memory_space<vmem>>, vector<1x16xf32>
    %4 = vector.broadcast %3 : vector<1x16xf32> to vector<128x16xf32>
    %5 = arith.addf %2, %4 : vector<128x16xf32>
    %cst_5 = arith.constant 0.000000e+00 : f32
    %6 = vector.broadcast %cst_5 : f32 to vector<128x16xf32>
    %7 = arith.maximumf %5, %6 : vector<128x16xf32>
    %8 = arith.truncf %7 : vector<128x16xf32> to vector<128x16xbf16>
    %c0_6 = arith.constant 0 : index
    %c0_7 = arith.constant 0 : index
    %9 = vector.load %arg4[%c0_6, %c0_7] : memref<128x16xbf16, #tpu.memory_space<vmem>>, vector<128x16xbf16>
    tpu.vector_store %arg4[%c0_6, %c0_7], %8 {strides = array<i32>} : memref<128x16xbf16, #tpu.memory_space<vmem>>, vector<128x16xbf16>,
    return
  }
  func.func @transform_0(%arg0: i32) -> (i32, i32) {
    %c0_i32 = arith.constant 0 : i32
    %c0_i32_0 = arith.constant 0 : i32
    return %arg0, %c0_i32 : i32, i32
  }
  func.func @transform_1(%arg0: i32) -> (i32, i32) {
    %c0_i32 = arith.constant 0 : i32
    %c0_i32_0 = arith.constant 0 : i32
    %c0_i32_1 = arith.constant 0 : i32
    return %c0_i32, %c0_i32_0 : i32, i32
  }
  func.func @transform_2(%arg0: i32) -> (i32, i32) {
    %c0_i32 = arith.constant 0 : i32
    %c0_i32_0 = arith.constant 0 : i32
    %c0_i32_1 = arith.constant 0 : i32
    return %c0_i32, %c0_i32_0 : i32, i32
  }
  func.func @transform_3(%arg0: i32) -> (i32, i32) {
    %c0_i32 = arith.constant 0 : i32
    %c0_i32_0 = arith.constant 0 : i32
    return %arg0, %c0_i32 : i32, i32
  }
}

module attributes {stable_mosaic.version = 11 : i64} {
  func.func @_matmul_bias_kernel(%arg0: i32, %arg1: memref<32x64xbf16, #tpu.memory_space<vmem>>, %arg2: memref<64x32xbf16, #tpu.memory_space<vmem>>, %arg3: memref<1x32xf32, #tpu.memory_space<vmem>>, %arg4: memref<32x32xbf16, #tpu.memory_space<vmem>>) attributes {dimension_semantics = [#tpu.dimension_semantics<parallel>], iteration_bounds = array<i64: 1>, scalar_prefetch = 0 : i64, scratch_operands = 0 : i64, tpu.core_type = #tpu.core_type<tc>, window_params = [{transform_indices = @transform_0, window_bounds = array<i64: 32, 64>}, {pipeline_mode = #tpu.pipeline_mode<synchronous>, transform_indices = @transform_1, window_bounds = array<i64: 64, 32>}, {pipeline_mode = #tpu.pipeline_mode<synchronous>, transform_indices = @transform_2, window_bounds = array<i64: 1, 32>}, {transform_indices = @transform_3, window_bounds = array<i64: 32, 32>}]} {
    %c0 = arith.constant 0 : index
    %c0_0 = arith.constant 0 : index
    %0 = vector.load %arg1[%c0, %c0_0] : memref<32x64xbf16, #tpu.memory_space<vmem>>, vector<32x64xbf16>
    %c0_1 = arith.constant 0 : index
    %c0_2 = arith.constant 0 : index
    %1 = vector.load %arg2[%c0_1, %c0_2] : memref<64x32xbf16, #tpu.memory_space<vmem>>, vector<64x32xbf16>
    %cst = arith.constant dense<0.000000e+00> : vector<32x32xf32>
    %2 = tpu.matmul %0, %1, %cst {dimension_numbers = #tpu.dot_dimension_numbers<[1], [0], [0], [1], [0, 0, 1, 1], [], []>} : vector<32x64xbf16>, vector<64x32xbf16>, vector<32x32xf32> -> vector<32x32xf32>
    %c0_3 = arith.constant 0 : index
    %c0_4 = arith.constant 0 : index
    %3 = vector.load %arg3[%c0_3, %c0_4] : memref<1x32xf32, #tpu.memory_space<vmem>>, vector<1x32xf32>
    %4 = vector.broadcast %3 : vector<1x32xf32> to vector<32x32xf32>
    %5 = arith.addf %2, %4 : vector<32x32xf32>
    %cst_5 = arith.constant 0.000000e+00 : f32
    %6 = vector.broadcast %cst_5 : f32 to vector<32x32xf32>
    %7 = arith.maximumf %5, %6 : vector<32x32xf32>
    %8 = arith.truncf %7 : vector<32x32xf32> to vector<32x32xbf16>
    %c0_6 = arith.constant 0 : index
    %c0_7 = arith.constant 0 : index
    %9 = vector.load %arg4[%c0_6, %c0_7] : memref<32x32xbf16, #tpu.memory_space<vmem>>, vector<32x32xbf16>
    tpu.vector_store %arg4[%c0_6, %c0_7], %8 {strides = array<i32>} : memref<32x32xbf16, #tpu.memory_space<vmem>>, vector<32x32xbf16>,
    return
  }
  func.func @transform_0(%arg0: i32) -> (i32, i32) {
    %c0_i32 = arith.constant 0 : i32
    %c0_i32_0 = arith.constant 0 : i32
    return %arg0, %c0_i32 : i32, i32
  }
  func.func @transform_1(%arg0: i32) -> (i32, i32) {
    %c0_i32 = arith.constant 0 : i32
    %c0_i32_0 = arith.constant 0 : i32
    %c0_i32_1 = arith.constant 0 : i32
    return %c0_i32, %c0_i32_0 : i32, i32
  }
  func.func @transform_2(%arg0: i32) -> (i32, i32) {
    %c0_i32 = arith.constant 0 : i32
    %c0_i32_0 = arith.constant 0 : i32
    %c0_i32_1 = arith.constant 0 : i32
    return %c0_i32, %c0_i32_0 : i32, i32
  }
  func.func @transform_3(%arg0: i32) -> (i32, i32) {
    %c0_i32 = arith.constant 0 : i32
    %c0_i32_0 = arith.constant 0 : i32
    return %arg0, %c0_i32 : i32, i32
  }
}

module attributes {stable_mosaic.version = 11 : i64} {
  func.func @_matmul_bias_kernel(%arg0: i32, %arg1: memref<8x128xbf16, #tpu.memory_space<vmem>>, %arg2: memref<128x64xbf16, #tpu.memory_space<vmem>>, %arg3: memref<1x64xf32, #tpu.memory_space<vmem>>, %arg4: memref<8x64xbf16, #tpu.memory_space<vmem>>) attributes {dimension_semantics = [#tpu.dimension_semantics<parallel>], iteration_bounds = array<i64: 1>, scalar_prefetch = 0 : i64, scratch_operands = 0 : i64, tpu.core_type = #tpu.core_type<tc>, window_params = [{transform_indices = @transform_0, window_bounds = array<i64: 8, 128>}, {pipeline_mode = #tpu.pipeline_mode<synchronous>, transform_indices = @transform_1, window_bounds = array<i64: 128, 64>}, {pipeline_mode = #tpu.pipeline_mode<synchronous>, transform_indices = @transform_2, window_bounds = array<i64: 1, 64>}, {transform_indices = @transform_3, window_bounds = array<i64: 8, 64>}]} {
    %c0 = arith.constant 0 : index
    %c0_0 = arith.constant 0 : index
    %0 = vector.load %arg1[%c0, %c0_0] : memref<8x128xbf16, #tpu.memory_space<vmem>>, vector<8x128xbf16>
    %c0_1 = arith.constant 0 : index
    %c0_2 = arith.constant 0 : index
    %1 = vector.load %arg2[%c0_1, %c0_2] : memref<128x64xbf16, #tpu.memory_space<vmem>>, vector<128x64xbf16>
    %cst = arith.constant dense<0.000000e+00> : vector<8x64xf32>
    %2 = tpu.matmul %0, %1, %cst {dimension_numbers = #tpu.dot_dimension_numbers<[1], [0], [0], [1], [0, 0, 1, 1], [], []>} : vector<8x128xbf16>, vector<128x64xbf16>, vector<8x64xf32> -> vector<8x64xf32>
    %c0_3 = arith.constant 0 : index
    %c0_4 = arith.constant 0 : index
    %3 = vector.load %arg3[%c0_3, %c0_4] : memref<1x64xf32, #tpu.memory_space<vmem>>, vector<1x64xf32>
    %4 = vector.broadcast %3 : vector<1x64xf32> to vector<8x64xf32>
    %5 = arith.addf %2, %4 : vector<8x64xf32>
    %cst_5 = arith.constant 0.000000e+00 : f32
    %6 = vector.broadcast %cst_5 : f32 to vector<8x64xf32>
    %7 = arith.maximumf %5, %6 : vector<8x64xf32>
    %8 = arith.truncf %7 : vector<8x64xf32> to vector<8x64xbf16>
    %c0_6 = arith.constant 0 : index
    %c0_7 = arith.constant 0 : index
    %9 = vector.load %arg4[%c0_6, %c0_7] : memref<8x64xbf16, #tpu.memory_space<vmem>>, vector<8x64xbf16>
    tpu.vector_store %arg4[%c0_6, %c0_7], %8 {strides = array<i32>} : memref<8x64xbf16, #tpu.memory_space<vmem>>, vector<8x64xbf16>,
    return
  }
  func.func @transform_0(%arg0: i32) -> (i32, i32) {
    %c0_i32 = arith.constant 0 : i32
    %c0_i32_0 = arith.constant 0 : i32
    return %arg0, %c0_i32 : i32, i32
  }
  func.func @transform_1(%arg0: i32) -> (i32, i32) {
    %c0_i32 = arith.constant 0 : i32
    %c0_i32_0 = arith.constant 0 : i32
    %c0_i32_1 = arith.constant 0 : i32
    return %c0_i32, %c0_i32_0 : i32, i32
  }
  func.func @transform_2(%arg0: i32) -> (i32, i32) {
    %c0_i32 = arith.constant 0 : i32
    %c0_i32_0 = arith.constant 0 : i32
    %c0_i32_1 = arith.constant 0 : i32
    return %c0_i32, %c0_i32_0 : i32, i32
  }
  func.func @transform_3(%arg0: i32) -> (i32, i32) {
    %c0_i32 = arith.constant 0 : i32
    %c0_i32_0 = arith.constant 0 : i32
    return %arg0, %c0_i32 : i32, i32
  }
}

module attributes {stable_mosaic.version = 11 : i64} {
  func.func @kernel(%arg0: i32, %arg1: memref<1x8x128xbf16, #tpu.memory_space<vmem>>, %arg2: memref<1x4x128xbf16, #tpu.memory_space<vmem>>, %arg3: memref<1x2x128xbf16, #tpu.memory_space<vmem>>, %arg4: memref<2x8xbf16, #tpu.memory_space<vmem>>, %arg5: memref<2x4xbf16, #tpu.memory_space<vmem>>, %arg6: memref<2x2xbf16, #tpu.memory_space<vmem>>, %arg7: memref<1x2x128xbf16, #tpu.memory_space<vmem>>, %arg8: memref<1x2x128xbf16, #tpu.memory_space<vmem>>, %arg9: memref<1x2x128xbf16, #tpu.memory_space<vmem>>) attributes {dimension_semantics = [#tpu.dimension_semantics<parallel>], iteration_bounds = array<i64: 2>, scalar_prefetch = 0 : i64, scratch_operands = 0 : i64, tpu.core_type = #tpu.core_type<tc>, window_params = [{transform_indices = @transform_0, window_bounds = array<i64: 1, 8, 128>}, {transform_indices = @transform_1, window_bounds = array<i64: 1, 4, 128>}, {transform_indices = @transform_2, window_bounds = array<i64: 1, 2, 128>}, {pipeline_mode = #tpu.pipeline_mode<synchronous>, transform_indices = @transform_3, window_bounds = array<i64: 2, 8>}, {pipeline_mode = #tpu.pipeline_mode<synchronous>, transform_indices = @transform_4, window_bounds = array<i64: 2, 4>}, {pipeline_mode = #tpu.pipeline_mode<synchronous>, transform_indices = @transform_5, window_bounds = array<i64: 2, 2>}, {transform_indices = @transform_6, window_bounds = array<i64: 1, 2, 128>}, {transform_indices = @transform_7, window_bounds = array<i64: 1, 2, 128>}, {transform_indices = @transform_8, window_bounds = array<i64: 1, 2, 128>}]} {
    %c0 = arith.constant 0 : index
    %c0_0 = arith.constant 0 : index
    %0 = vector.load %arg4[%c0, %c0_0] : memref<2x8xbf16, #tpu.memory_space<vmem>>, vector<2x8xbf16>
    %c0_1 = arith.constant 0 : index
    %c0_2 = arith.constant 0 : index
    %c0_3 = arith.constant 0 : index
    %1 = vector.load %arg1[%c0_1, %c0_2, %c0_3] : memref<1x8x128xbf16, #tpu.memory_space<vmem>>, vector<1x8x128xbf16>
    %2 = vector.shape_cast %1 : vector<1x8x128xbf16> to vector<8x128xbf16>
    %cst = arith.constant dense<0.000000e+00> : vector<2x128xf32>
    %3 = tpu.matmul %0, %2, %cst {dimension_numbers = #tpu.dot_dimension_numbers<[1], [0], [0], [1], [0, 0, 1, 1], [], []>} : vector<2x8xbf16>, vector<8x128xbf16>, vector<2x128xf32> -> vector<2x128xf32>
    %4 = arith.truncf %3 : vector<2x128xf32> to vector<2x128xbf16>
    %c0_4 = arith.constant 0 : index
    %c0_5 = arith.constant 0 : index
    %c0_6 = arith.constant 0 : index
    %5 = vector.load %arg7[%c0_4, %c0_5, %c0_6] : memref<1x2x128xbf16, #tpu.memory_space<vmem>>, vector<1x2x128xbf16>
    %6 = vector.shape_cast %5 : vector<1x2x128xbf16> to vector<2x128xbf16>
    %7 = vector.shape_cast %4 : vector<2x128xbf16> to vector<1x2x128xbf16>
    tpu.vector_store %arg7[%c0_4, %c0_5, %c0_6], %7 {strides = array<i32>} : memref<1x2x128xbf16, #tpu.memory_space<vmem>>, vector<1x2x128xbf16>,
    %c0_7 = arith.constant 0 : index
    %c0_8 = arith.constant 0 : index
    %8 = vector.load %arg5[%c0_7, %c0_8] : memref<2x4xbf16, #tpu.memory_space<vmem>>, vector<2x4xbf16>
    %c0_9 = arith.constant 0 : index
    %c0_10 = arith.constant 0 : index
    %c0_11 = arith.constant 0 : index
    %9 = vector.load %arg2[%c0_9, %c0_10, %c0_11] : memref<1x4x128xbf16, #tpu.memory_space<vmem>>, vector<1x4x128xbf16>
    %10 = vector.shape_cast %9 : vector<1x4x128xbf16> to vector<4x128xbf16>
    %cst_12 = arith.constant dense<0.000000e+00> : vector<2x128xf32>
    %11 = tpu.matmul %8, %10, %cst_12 {dimension_numbers = #tpu.dot_dimension_numbers<[1], [0], [0], [1], [0, 0, 1, 1], [], []>} : vector<2x4xbf16>, vector<4x128xbf16>, vector<2x128xf32> -> vector<2x128xf32>
    %12 = arith.truncf %11 : vector<2x128xf32> to vector<2x128xbf16>
    %c0_13 = arith.constant 0 : index
    %c0_14 = arith.constant 0 : index
    %c0_15 = arith.constant 0 : index
    %13 = vector.load %arg8[%c0_13, %c0_14, %c0_15] : memref<1x2x128xbf16, #tpu.memory_space<vmem>>, vector<1x2x128xbf16>
    %14 = vector.shape_cast %13 : vector<1x2x128xbf16> to vector<2x128xbf16>
    %15 = vector.shape_cast %12 : vector<2x128xbf16> to vector<1x2x128xbf16>
    tpu.vector_store %arg8[%c0_13, %c0_14, %c0_15], %15 {strides = array<i32>} : memref<1x2x128xbf16, #tpu.memory_space<vmem>>, vector<1x2x128xbf16>,
    %c0_16 = arith.constant 0 : index
    %c0_17 = arith.constant 0 : index
    %16 = vector.load %arg6[%c0_16, %c0_17] : memref<2x2xbf16, #tpu.memory_space<vmem>>, vector<2x2xbf16>
    %c0_18 = arith.constant 0 : index
    %c0_19 = arith.constant 0 : index
    %c0_20 = arith.constant 0 : index
    %17 = vector.load %arg3[%c0_18, %c0_19, %c0_20] : memref<1x2x128xbf16, #tpu.memory_space<vmem>>, vector<1x2x128xbf16>
    %18 = vector.shape_cast %17 : vector<1x2x128xbf16> to vector<2x128xbf16>
    %cst_21 = arith.constant dense<0.000000e+00> : vector<2x128xf32>
    %19 = tpu.matmul %16, %18, %cst_21 {dimension_numbers = #tpu.dot_dimension_numbers<[1], [0], [0], [1], [0, 0, 1, 1], [], []>} : vector<2x2xbf16>, vector<2x128xbf16>, vector<2x128xf32> -> vector<2x128xf32>
    %20 = arith.truncf %19 : vector<2x128xf32> to vector<2x128xbf16>
    %c0_22 = arith.constant 0 : index
    %c0_23 = arith.constant 0 : index
    %c0_24 = arith.constant 0 : index
    %21 = vector.load %arg9[%c0_22, %c0_23, %c0_24] : memref<1x2x128xbf16, #tpu.memory_space<vmem>>, vector<1x2x128xbf16>
    %22 = vector.shape_cast %21 : vector<1x2x128xbf16> to vector<2x128xbf16>
    %23 = vector.shape_cast %20 : vector<2x128xbf16> to vector<1x2x128xbf16>
    tpu.vector_store %arg9[%c0_22, %c0_23, %c0_24], %23 {strides = array<i32>} : memref<1x2x128xbf16, #tpu.memory_space<vmem>>, vector<1x2x128xbf16>,
    return
  }
  func.func @transform_0(%arg0: i32) -> (i32, i32, i32) {
    %c0_i32 = arith.constant 0 : i32
    %c0_i32_0 = arith.constant 0 : i32
    %c0_i32_1 = arith.constant 0 : i32
    return %arg0, %c0_i32, %c0_i32_0 : i32, i32, i32
  }
  func.func @transform_1(%arg0: i32) -> (i32, i32, i32) {
    %c0_i32 = arith.constant 0 : i32
    %c0_i32_0 = arith.constant 0 : i32
    %c0_i32_1 = arith.constant 0 : i32
    return %arg0, %c0_i32, %c0_i32_0 : i32, i32, i32
  }
  func.func @transform_2(%arg0: i32) -> (i32, i32, i32) {
    %c0_i32 = arith.constant 0 : i32
    %c0_i32_0 = arith.constant 0 : i32
    %c0_i32_1 = arith.constant 0 : i32
    return %arg0, %c0_i32, %c0_i32_0 : i32, i32, i32
  }
  func.func @transform_3(%arg0: i32) -> (i32, i32) {
    %c0_i32 = arith.constant 0 : i32
    %c0_i32_0 = arith.constant 0 : i32
    %c0_i32_1 = arith.constant 0 : i32
    return %c0_i32, %c0_i32_0 : i32, i32
  }
  func.func @transform_4(%arg0: i32) -> (i32, i32) {
    %c0_i32 = arith.constant 0 : i32
    %c0_i32_0 = arith.constant 0 : i32
    %c0_i32_1 = arith.constant 0 : i32
    return %c0_i32, %c0_i32_0 : i32, i32
  }
  func.func @transform_5(%arg0: i32) -> (i32, i32) {
    %c0_i32 = arith.constant 0 : i32
    %c0_i32_0 = arith.constant 0 : i32
    %c0_i32_1 = arith.constant 0 : i32
    return %c0_i32, %c0_i32_0 : i32, i32
  }
  func.func @transform_6(%arg0: i32) -> (i32, i32, i32) {
    %c0_i32 = arith.constant 0 : i32
    %c0_i32_0 = arith.constant 0 : i32
    %c0_i32_1 = arith.constant 0 : i32
    return %arg0, %c0_i32, %c0_i32_0 : i32, i32, i32
  }
  func.func @transform_7(%arg0: i32) -> (i32, i32, i32) {
    %c0_i32 = arith.constant 0 : i32
    %c0_i32_0 = arith.constant 0 : i32
    %c0_i32_1 = arith.constant 0 : i32
    return %arg0, %c0_i32, %c0_i32_0 : i32, i32, i32
  }
  func.func @transform_8(%arg0: i32) -> (i32, i32, i32) {
    %c0_i32 = arith.constant 0 : i32
    %c0_i32_0 = arith.constant 0 : i32
    %c0_i32_1 = arith.constant 0 : i32
    return %arg0, %c0_i32, %c0_i32_0 : i32, i32, i32
  }
}

module attributes {stable_mosaic.version = 11 : i64} {
  func.func @kernel(%arg0: i32, %arg1: memref<1x8x32xbf16, #tpu.memory_space<vmem>>, %arg2: memref<1x4x64xbf16, #tpu.memory_space<vmem>>, %arg3: memref<1x2x128xbf16, #tpu.memory_space<vmem>>, %arg4: memref<2x8xbf16, #tpu.memory_space<vmem>>, %arg5: memref<2x4xbf16, #tpu.memory_space<vmem>>, %arg6: memref<2x2xbf16, #tpu.memory_space<vmem>>, %arg7: memref<1x2x32xbf16, #tpu.memory_space<vmem>>, %arg8: memref<1x2x64xbf16, #tpu.memory_space<vmem>>, %arg9: memref<1x2x128xbf16, #tpu.memory_space<vmem>>) attributes {dimension_semantics = [#tpu.dimension_semantics<parallel>], iteration_bounds = array<i64: 2>, scalar_prefetch = 0 : i64, scratch_operands = 0 : i64, tpu.core_type = #tpu.core_type<tc>, window_params = [{transform_indices = @transform_0, window_bounds = array<i64: 1, 8, 32>}, {transform_indices = @transform_1, window_bounds = array<i64: 1, 4, 64>}, {transform_indices = @transform_2, window_bounds = array<i64: 1, 2, 128>}, {pipeline_mode = #tpu.pipeline_mode<synchronous>, transform_indices = @transform_3, window_bounds = array<i64: 2, 8>}, {pipeline_mode = #tpu.pipeline_mode<synchronous>, transform_indices = @transform_4, window_bounds = array<i64: 2, 4>}, {pipeline_mode = #tpu.pipeline_mode<synchronous>, transform_indices = @transform_5, window_bounds = array<i64: 2, 2>}, {transform_indices = @transform_6, window_bounds = array<i64: 1, 2, 32>}, {transform_indices = @transform_7, window_bounds = array<i64: 1, 2, 64>}, {transform_indices = @transform_8, window_bounds = array<i64: 1, 2, 128>}]} {
    %c0 = arith.constant 0 : index
    %c0_0 = arith.constant 0 : index
    %0 = vector.load %arg4[%c0, %c0_0] : memref<2x8xbf16, #tpu.memory_space<vmem>>, vector<2x8xbf16>
    %c0_1 = arith.constant 0 : index
    %c0_2 = arith.constant 0 : index
    %c0_3 = arith.constant 0 : index
    %1 = vector.load %arg1[%c0_1, %c0_2, %c0_3] : memref<1x8x32xbf16, #tpu.memory_space<vmem>>, vector<1x8x32xbf16>
    %2 = vector.shape_cast %1 : vector<1x8x32xbf16> to vector<8x32xbf16>
    %cst = arith.constant dense<0.000000e+00> : vector<2x32xf32>
    %3 = tpu.matmul %0, %2, %cst {dimension_numbers = #tpu.dot_dimension_numbers<[1], [0], [0], [1], [0, 0, 1, 1], [], []>} : vector<2x8xbf16>, vector<8x32xbf16>, vector<2x32xf32> -> vector<2x32xf32>
    %4 = arith.truncf %3 : vector<2x32xf32> to vector<2x32xbf16>
    %c0_4 = arith.constant 0 : index
    %c0_5 = arith.constant 0 : index
    %c0_6 = arith.constant 0 : index
    %5 = vector.load %arg7[%c0_4, %c0_5, %c0_6] : memref<1x2x32xbf16, #tpu.memory_space<vmem>>, vector<1x2x32xbf16>
    %6 = vector.shape_cast %5 : vector<1x2x32xbf16> to vector<2x32xbf16>
    %7 = vector.shape_cast %4 : vector<2x32xbf16> to vector<1x2x32xbf16>
    tpu.vector_store %arg7[%c0_4, %c0_5, %c0_6], %7 {strides = array<i32>} : memref<1x2x32xbf16, #tpu.memory_space<vmem>>, vector<1x2x32xbf16>,
    %c0_7 = arith.constant 0 : index
    %c0_8 = arith.constant 0 : index
    %8 = vector.load %arg5[%c0_7, %c0_8] : memref<2x4xbf16, #tpu.memory_space<vmem>>, vector<2x4xbf16>
    %c0_9 = arith.constant 0 : index
    %c0_10 = arith.constant 0 : index
    %c0_11 = arith.constant 0 : index
    %9 = vector.load %arg2[%c0_9, %c0_10, %c0_11] : memref<1x4x64xbf16, #tpu.memory_space<vmem>>, vector<1x4x64xbf16>
    %10 = vector.shape_cast %9 : vector<1x4x64xbf16> to vector<4x64xbf16>
    %cst_12 = arith.constant dense<0.000000e+00> : vector<2x64xf32>
    %11 = tpu.matmul %8, %10, %cst_12 {dimension_numbers = #tpu.dot_dimension_numbers<[1], [0], [0], [1], [0, 0, 1, 1], [], []>} : vector<2x4xbf16>, vector<4x64xbf16>, vector<2x64xf32> -> vector<2x64xf32>
    %12 = arith.truncf %11 : vector<2x64xf32> to vector<2x64xbf16>
    %c0_13 = arith.constant 0 : index
    %c0_14 = arith.constant 0 : index
    %c0_15 = arith.constant 0 : index
    %13 = vector.load %arg8[%c0_13, %c0_14, %c0_15] : memref<1x2x64xbf16, #tpu.memory_space<vmem>>, vector<1x2x64xbf16>
    %14 = vector.shape_cast %13 : vector<1x2x64xbf16> to vector<2x64xbf16>
    %15 = vector.shape_cast %12 : vector<2x64xbf16> to vector<1x2x64xbf16>
    tpu.vector_store %arg8[%c0_13, %c0_14, %c0_15], %15 {strides = array<i32>} : memref<1x2x64xbf16, #tpu.memory_space<vmem>>, vector<1x2x64xbf16>,
    %c0_16 = arith.constant 0 : index
    %c0_17 = arith.constant 0 : index
    %16 = vector.load %arg6[%c0_16, %c0_17] : memref<2x2xbf16, #tpu.memory_space<vmem>>, vector<2x2xbf16>
    %c0_18 = arith.constant 0 : index
    %c0_19 = arith.constant 0 : index
    %c0_20 = arith.constant 0 : index
    %17 = vector.load %arg3[%c0_18, %c0_19, %c0_20] : memref<1x2x128xbf16, #tpu.memory_space<vmem>>, vector<1x2x128xbf16>
    %18 = vector.shape_cast %17 : vector<1x2x128xbf16> to vector<2x128xbf16>
    %cst_21 = arith.constant dense<0.000000e+00> : vector<2x128xf32>
    %19 = tpu.matmul %16, %18, %cst_21 {dimension_numbers = #tpu.dot_dimension_numbers<[1], [0], [0], [1], [0, 0, 1, 1], [], []>} : vector<2x2xbf16>, vector<2x128xbf16>, vector<2x128xf32> -> vector<2x128xf32>
    %20 = arith.truncf %19 : vector<2x128xf32> to vector<2x128xbf16>
    %c0_22 = arith.constant 0 : index
    %c0_23 = arith.constant 0 : index
    %c0_24 = arith.constant 0 : index
    %21 = vector.load %arg9[%c0_22, %c0_23, %c0_24] : memref<1x2x128xbf16, #tpu.memory_space<vmem>>, vector<1x2x128xbf16>
    %22 = vector.shape_cast %21 : vector<1x2x128xbf16> to vector<2x128xbf16>
    %23 = vector.shape_cast %20 : vector<2x128xbf16> to vector<1x2x128xbf16>
    tpu.vector_store %arg9[%c0_22, %c0_23, %c0_24], %23 {strides = array<i32>} : memref<1x2x128xbf16, #tpu.memory_space<vmem>>, vector<1x2x128xbf16>,
    return
  }
  func.func @transform_0(%arg0: i32) -> (i32, i32, i32) {
    %c0_i32 = arith.constant 0 : i32
    %c0_i32_0 = arith.constant 0 : i32
    %c0_i32_1 = arith.constant 0 : i32
    return %arg0, %c0_i32, %c0_i32_0 : i32, i32, i32
  }
  func.func @transform_1(%arg0: i32) -> (i32, i32, i32) {
    %c0_i32 = arith.constant 0 : i32
    %c0_i32_0 = arith.constant 0 : i32
    %c0_i32_1 = arith.constant 0 : i32
    return %arg0, %c0_i32, %c0_i32_0 : i32, i32, i32
  }
  func.func @transform_2(%arg0: i32) -> (i32, i32, i32) {
    %c0_i32 = arith.constant 0 : i32
    %c0_i32_0 = arith.constant 0 : i32
    %c0_i32_1 = arith.constant 0 : i32
    return %arg0, %c0_i32, %c0_i32_0 : i32, i32, i32
  }
  func.func @transform_3(%arg0: i32) -> (i32, i32) {
    %c0_i32 = arith.constant 0 : i32
    %c0_i32_0 = arith.constant 0 : i32
    %c0_i32_1 = arith.constant 0 : i32
    return %c0_i32, %c0_i32_0 : i32, i32
  }
  func.func @transform_4(%arg0: i32) -> (i32, i32) {
    %c0_i32 = arith.constant 0 : i32
    %c0_i32_0 = arith.constant 0 : i32
    %c0_i32_1 = arith.constant 0 : i32
    return %c0_i32, %c0_i32_0 : i32, i32
  }
  func.func @transform_5(%arg0: i32) -> (i32, i32) {
    %c0_i32 = arith.constant 0 : i32
    %c0_i32_0 = arith.constant 0 : i32
    %c0_i32_1 = arith.constant 0 : i32
    return %c0_i32, %c0_i32_0 : i32, i32
  }
  func.func @transform_6(%arg0: i32) -> (i32, i32, i32) {
    %c0_i32 = arith.constant 0 : i32
    %c0_i32_0 = arith.constant 0 : i32
    %c0_i32_1 = arith.constant 0 : i32
    return %arg0, %c0_i32, %c0_i32_0 : i32, i32, i32
  }
  func.func @transform_7(%arg0: i32) -> (i32, i32, i32) {
    %c0_i32 = arith.constant 0 : i32
    %c0_i32_0 = arith.constant 0 : i32
    %c0_i32_1 = arith.constant 0 : i32
    return %arg0, %c0_i32, %c0_i32_0 : i32, i32, i32
  }
  func.func @transform_8(%arg0: i32) -> (i32, i32, i32) {
    %c0_i32 = arith.constant 0 : i32
    %c0_i32_0 = arith.constant 0 : i32
    %c0_i32_1 = arith.constant 0 : i32
    return %arg0, %c0_i32, %c0_i32_0 : i32, i32, i32
  }
}

module attributes {stable_mosaic.version = 11 : i64} {
  func.func @_matmul_bias_kernel(%arg0: i32, %arg1: memref<8x112xbf16, #tpu.memory_space<vmem>>, %arg2: memref<112x16xbf16, #tpu.memory_space<vmem>>, %arg3: memref<1x16xf32, #tpu.memory_space<vmem>>, %arg4: memref<8x16xf32, #tpu.memory_space<vmem>>) attributes {dimension_semantics = [#tpu.dimension_semantics<parallel>], iteration_bounds = array<i64: 1>, scalar_prefetch = 0 : i64, scratch_operands = 0 : i64, tpu.core_type = #tpu.core_type<tc>, window_params = [{transform_indices = @transform_0, window_bounds = array<i64: 8, 112>}, {pipeline_mode = #tpu.pipeline_mode<synchronous>, transform_indices = @transform_1, window_bounds = array<i64: 112, 16>}, {pipeline_mode = #tpu.pipeline_mode<synchronous>, transform_indices = @transform_2, window_bounds = array<i64: 1, 16>}, {transform_indices = @transform_3, window_bounds = array<i64: 8, 16>}]} {
    %c0 = arith.constant 0 : index
    %c0_0 = arith.constant 0 : index
    %0 = vector.load %arg1[%c0, %c0_0] : memref<8x112xbf16, #tpu.memory_space<vmem>>, vector<8x112xbf16>
    %c0_1 = arith.constant 0 : index
    %c0_2 = arith.constant 0 : index
    %1 = vector.load %arg2[%c0_1, %c0_2] : memref<112x16xbf16, #tpu.memory_space<vmem>>, vector<112x16xbf16>
    %cst = arith.constant dense<0.000000e+00> : vector<8x16xf32>
    %2 = tpu.matmul %0, %1, %cst {dimension_numbers = #tpu.dot_dimension_numbers<[1], [0], [0], [1], [0, 0, 1, 1], [], []>} : vector<8x112xbf16>, vector<112x16xbf16>, vector<8x16xf32> -> vector<8x16xf32>
    %c0_3 = arith.constant 0 : index
    %c0_4 = arith.constant 0 : index
    %3 = vector.load %arg3[%c0_3, %c0_4] : memref<1x16xf32, #tpu.memory_space<vmem>>, vector<1x16xf32>
    %4 = vector.broadcast %3 : vector<1x16xf32> to vector<8x16xf32>
    %5 = arith.addf %2, %4 : vector<8x16xf32>
    %c0_5 = arith.constant 0 : index
    %c0_6 = arith.constant 0 : index
    %6 = vector.load %arg4[%c0_5, %c0_6] : memref<8x16xf32, #tpu.memory_space<vmem>>, vector<8x16xf32>
    tpu.vector_store %arg4[%c0_5, %c0_6], %5 {strides = array<i32>} : memref<8x16xf32, #tpu.memory_space<vmem>>, vector<8x16xf32>,
    return
  }
  func.func @transform_0(%arg0: i32) -> (i32, i32) {
    %c0_i32 = arith.constant 0 : i32
    %c0_i32_0 = arith.constant 0 : i32
    return %arg0, %c0_i32 : i32, i32
  }
  func.func @transform_1(%arg0: i32) -> (i32, i32) {
    %c0_i32 = arith.constant 0 : i32
    %c0_i32_0 = arith.constant 0 : i32
    %c0_i32_1 = arith.constant 0 : i32
    return %c0_i32, %c0_i32_0 : i32, i32
  }
  func.func @transform_2(%arg0: i32) -> (i32, i32) {
    %c0_i32 = arith.constant 0 : i32
    %c0_i32_0 = arith.constant 0 : i32
    %c0_i32_1 = arith.constant 0 : i32
    return %c0_i32, %c0_i32_0 : i32, i32
  }
  func.func @transform_3(%arg0: i32) -> (i32, i32) {
    %c0_i32 = arith.constant 0 : i32
    %c0_i32_0 = arith.constant 0 : i32
    return %arg0, %c0_i32 : i32, i32
  }
}

</mosaic_0001>

<llo_original>
// kernel: efficientvit_forward.6
$region0: #{efficientvit_forward.6}
  #allocation0 [shape = 'u32[]', space=smem, size = 0x4, offset = 0x4, fixed_abs, tag = 'smem constant byte address 0x4 - core index']
  #allocation1 [shape = 'u32[144,128]{1,0:T(1,128)}', space=vmem, size = 0x12000, scoped, tag = 'internal scratch']
  %s0 = inlined_call_operand.vmem [shape: bf16[128,64], index: 0, kind: input, shape index: {}]
  %s1 = inlined_call_operand.vmem [shape: bf16[64,16], index: 1, kind: input, shape index: {}]
  %s2 = inlined_call_operand.vmem [shape: f32[1,16], index: 2, kind: input, shape index: {}]
  %s3 = inlined_call_operand.vmem [shape: bf16[128,16], index: 3, kind: output, shape index: {}]
  %s4 = sld [smem:[#allocation0]]
  $region22: #{efficientvit_forward.6} parent=0
    _
  %s6 = ssub.s32 1, %s4
  %s7 = scalar_select 0, %s6, %s4
  // Predicated region
  $region2: #{efficientvit_forward.6} parent=0 // pred_check
    _
  $region3: #{efficientvit_forward.6} parent=0 // pred_check_branch
    %9 = sbr.rel (0) target = $region5
  $region4: #{efficientvit_forward.6} parent=0 // pred_region
    _
  $region5: #{efficientvit_forward.6} parent=0 // pred_fallthru
    _
  // Predicated region
  $region6: #{efficientvit_forward.6} parent=0 // pred_check
    _
  $region7: #{efficientvit_forward.6} parent=0 // pred_check_branch
    %11 = sbr.rel (0) target = $region9
  $region8: #{efficientvit_forward.6} parent=0 // pred_region
    _
  $region9: #{efficientvit_forward.6} parent=0 // pred_fallthru
    _
  // Predicated region
  $region10: #{efficientvit_forward.6} parent=0 // pred_check
    _
  $region11: #{efficientvit_forward.6} parent=0 // pred_check_branch
    %13 = sbr.rel (0) target = $region13
  $region12: #{efficientvit_forward.6} parent=0 // pred_region
    _
  $region13: #{efficientvit_forward.6} parent=0 // pred_fallthru
    _
  %v15 = vld [vmem:[%s0] sm:$0xf]
  %v16 = vld [vmem:[%s0 + $0x4] sm:$0xf]
  %v17 = vld [vmem:[%s0 + $0x8] sm:$0xf]
  %v18 = vld [vmem:[%s0 + $0xc] sm:$0xf]
  %v19 = vld [vmem:[%s0 + $0x10] sm:$0xf]
  %v20 = vld [vmem:[%s0 + $0x14] sm:$0xf]
  %v21 = vld [vmem:[%s0 + $0x18] sm:$0xf]
  %v22 = vld [vmem:[%s0 + $0x1c] sm:$0xf]
  %v23 = vld [vmem:[%s0 + $0x20] sm:$0xf]
  %v24 = vld [vmem:[%s0 + $0x24] sm:$0xf]
  %v25 = vld [vmem:[%s0 + $0x28] sm:$0xf]
  %v26 = vld [vmem:[%s0 + $0x2c] sm:$0xf]
  %v27 = vld [vmem:[%s0 + $0x30] sm:$0xf]
  %v28 = vld [vmem:[%s0 + $0x34] sm:$0xf]
  %v29 = vld [vmem:[%s0 + $0x38] sm:$0xf]
  %v30 = vld [vmem:[%s0 + $0x3c] sm:$0xf]
  %v31 = vld [vmem:[%s1] sm:$0xf]
  %v32 = vld [vmem:[%s1 + $0x4] sm:$0xf]
  %v33 = vld [vmem:[%s1 + $0x8] sm:$0xf]
  %v34 = vld [vmem:[%s1 + $0xc] sm:$0xf]
  %v35 = vld [vmem:[%s1 + $0x10] sm:$0xf]
  %v36 = vld [vmem:[%s1 + $0x14] sm:$0xf]
  %v37 = vld [vmem:[%s1 + $0x18] sm:$0xf]
  %v38 = vld [vmem:[%s1 + $0x1c] sm:$0xf]
  %v39 = vld [vmem:[%s2] sm:$0x1]
  %v41 = vlaneseq
  %v42 = vshrl.u32 %v41, 7
  %v43 = vsub.s32 0, %v42
  %v44 = vrot.slane %v39, %v43
  %v62 = vunpack.c.l.b16 %v15
  %v63 = vunpack.c.l.b16 %v16
  %v64 = vunpack.c.l.b16 %v17
  %v65 = vunpack.c.l.b16 %v18
  %v66 = vunpack.c.l.b16 %v19
  %v67 = vunpack.c.l.b16 %v20
  %v68 = vunpack.c.l.b16 %v21
  %v69 = vunpack.c.l.b16 %v22
  %v70 = vunpack.c.l.b16 %v23
  %v71 = vunpack.c.l.b16 %v24
  %v72 = vunpack.c.l.b16 %v25
  %v73 = vunpack.c.l.b16 %v26
  %v74 = vunpack.c.l.b16 %v27
  %v75 = vunpack.c.l.b16 %v28
  %v76 = vunpack.c.l.b16 %v29
  %v77 = vunpack.c.l.b16 %v30
  %v78 = vpack.c.b16 %v63, %v62
  %v79 = vpack.c.b16 %v65, %v64
  %v80 = vpack.c.b16 %v67, %v66
  %v81 = vpack.c.b16 %v69, %v68
  %v82 = vpack.c.b16 %v71, %v70
  %v83 = vpack.c.b16 %v73, %v72
  %v84 = vpack.c.b16 %v75, %v74
  %v85 = vpack.c.b16 %v77, %v76
  %v94 = vunpack.c.l.b16 %v31
  %v95 = vunpack.c.l.b16 %v32
  %v96 = vunpack.c.l.b16 %v33
  %v97 = vunpack.c.l.b16 %v34
  %v98 = vunpack.c.l.b16 %v35
  %v99 = vunpack.c.l.b16 %v36
  %v100 = vunpack.c.l.b16 %v37
  %v101 = vunpack.c.l.b16 %v38
  %v102 = vpack.c.b16 %v95, %v94
  %v103 = vpack.c.b16 %v97, %v96
  %v104 = vpack.c.b16 %v99, %v98
  %v105 = vpack.c.b16 %v101, %v100
  %vm110 = vcmask 523264
  %v112 = vsel %vm110, %v78, 0
  %v115 = vsel %vm110, %v79, 0
  %v118 = vsel %vm110, %v80, 0
  %v121 = vsel %vm110, %v81, 0
  %v124 = vsel %vm110, %v82, 0
  %v127 = vsel %vm110, %v83, 0
  %v130 = vsel %vm110, %v84, 0
  %v133 = vsel %vm110, %v85, 0
  %135 = vmatprep.subr.bf16.mxu0 0
  %136 = vmatpush1.bf16.msra.mxu0 0
  %137 = vmatprep.subr.bf16.mxu0 0
  %138 = vmatpush1.bf16.msra.mxu0 0
  %139 = vmatprep.subr.bf16.mxu0 0
  %140 = vmatpush1.bf16.msra.mxu0 0
  %141 = vmatprep.subr.bf16.mxu0 0
  %142 = vmatpush1.bf16.msra.mxu0 0
  %143 = vmatprep.subr.bf16.mxu0 0
  %144 = vmatpush1.bf16.msra.mxu0 %v105
  %145 = vmatprep.subr.bf16.mxu0 0
  %146 = vmatpush1.bf16.msra.mxu0 %v104
  %147 = vmatprep.subr.bf16.mxu0 0
  %148 = vmatpush1.bf16.msra.mxu0 %v103
  %149 = vmatprep.subr.bf16.mxu0 0
  %150 = vmatpush1.bf16.msra.mxu0 %v102
  %151 = vmatprep.subr.bf16.mxu0 0
  %152 = vmatpush2.bf16.msra.mxu0 0
  %153 = vmatprep.subr.bf16.mxu0 0
  %154 = vmatpush2.bf16.msra.mxu0 0
  %155 = vmatprep.subr.bf16.mxu0 0
  %156 = vmatpush2.bf16.msra.mxu0 0
  %157 = vmatprep.subr.bf16.mxu0 0
  %158 = vmatpush2.bf16.msra.mxu0 0
  %159 = vmatprep.subr.bf16.mxu0 0
  %160 = vmatpush2.bf16.msra.mxu0 0
  %161 = vmatprep.subr.bf16.mxu0 0
  %162 = vmatpush2.bf16.msra.mxu0 0
  %163 = vmatprep.subr.bf16.mxu0 0
  %164 = vmatpush2.bf16.msra.mxu0 0
  %165 = vmatprep.subr.bf16.mxu0 0
  %166 = vmatpush2.bf16.msra.mxu0 0
  %167 = vmatprep.mubr.bf16.mxu0 0
  %168 = vmatmul.mubr.bf16.gmra.mxu0 %v112
  %v169 = vpop.f32.mrf.mxu0
  %v170 = vadd.f32 %v44, %v169
  %v171 = vpop.f32.mrf.mxu0
  %v172 = vpop.f32.mrf.mxu0
  %v173 = vadd.f32 %v44, %v172
  %v174 = vpop.f32.mrf.mxu0
  %175 = vmatprep.mubr.bf16.mxu0 0
  %176 = vmatmul.mubr.bf16.gmra.mxu0 %v115
  %v177 = vpop.f32.mrf.mxu0
  %v178 = vadd.f32 %v44, %v177
  %v179 = vpop.f32.mrf.mxu0
  %v180 = vpop.f32.mrf.mxu0
  %v181 = vadd.f32 %v44, %v180
  %v182 = vpop.f32.mrf.mxu0
  %183 = vmatprep.mubr.bf16.mxu0 0
  %184 = vmatmul.mubr.bf16.gmra.mxu0 %v118
  %v185 = vpop.f32.mrf.mxu0
  %v186 = vadd.f32 %v44, %v185
  %v187 = vpop.f32.mrf.mxu0
  %v188 = vpop.f32.mrf.mxu0
  %v189 = vadd.f32 %v44, %v188
  %v190 = vpop.f32.mrf.mxu0
  %191 = vmatprep.mubr.bf16.mxu0 0
  %192 = vmatmul.mubr.bf16.gmra.mxu0 %v121
  %v193 = vpop.f32.mrf.mxu0
  %v194 = vadd.f32 %v44, %v193
  %v195 = vpop.f32.mrf.mxu0
  %v196 = vpop.f32.mrf.mxu0
  %v197 = vadd.f32 %v44, %v196
  %v198 = vpop.f32.mrf.mxu0
  %199 = vmatprep.mubr.bf16.mxu0 0
  %200 = vmatmul.mubr.bf16.gmra.mxu0 %v124
  %v201 = vpop.f32.mrf.mxu0
  %v202 = vadd.f32 %v44, %v201
  %v203 = vpop.f32.mrf.mxu0
  %v204 = vpop.f32.mrf.mxu0
  %v205 = vadd.f32 %v44, %v204
  %v206 = vpop.f32.mrf.mxu0
  %207 = vmatprep.mubr.bf16.mxu0 0
  %208 = vmatmul.mubr.bf16.gmra.mxu0 %v127
  %v209 = vpop.f32.mrf.mxu0
  %v210 = vadd.f32 %v44, %v209
  %v211 = vpop.f32.mrf.mxu0
  %v212 = vpop.f32.mrf.mxu0
  %v213 = vadd.f32 %v44, %v212
  %v214 = vpop.f32.mrf.mxu0
  %215 = vmatprep.mubr.bf16.mxu0 0
  %216 = vmatmul.mubr.bf16.gmra.mxu0 %v130
  %v217 = vpop.f32.mrf.mxu0
  %v218 = vadd.f32 %v44, %v217
  %v219 = vpop.f32.mrf.mxu0
  %v220 = vpop.f32.mrf.mxu0
  %v221 = vadd.f32 %v44, %v220
  %v222 = vpop.f32.mrf.mxu0
  %223 = vmatprep.mubr.bf16.mxu0 0
  %224 = vmatmul.mubr.bf16.gmra.mxu0 %v133
  %v225 = vpop.f32.mrf.mxu0
  %v226 = vadd.f32 %v44, %v225
  %v227 = vpop.f32.mrf.mxu0
  %v228 = vpop.f32.mrf.mxu0
  %v229 = vadd.f32 %v44, %v228
  %v230 = vpop.f32.mrf.mxu0
  %231 = vdwg.mxu0
  %v232 = vmax.f32 %v170, 0.0
  %v233 = vmax.f32 %v173, 0.0
  %v234 = vmax.f32 %v178, 0.0
  %v235 = vmax.f32 %v181, 0.0
  %v236 = vmax.f32 %v186, 0.0
  %v237 = vmax.f32 %v189, 0.0
  %v238 = vmax.f32 %v194, 0.0
  %v239 = vmax.f32 %v197, 0.0
  %v240 = vmax.f32 %v202, 0.0
  %v241 = vmax.f32 %v205, 0.0
  %v242 = vmax.f32 %v210, 0.0
  %v243 = vmax.f32 %v213, 0.0
  %v244 = vmax.f32 %v218, 0.0
  %v245 = vmax.f32 %v221, 0.0
  %v246 = vmax.f32 %v226, 0.0
  %v247 = vmax.f32 %v229, 0.0
  %v248 = vpack.c.bf16 %v233, %v232
  %v249 = vpack.c.bf16 %v235, %v234
  %v250 = vpack.c.bf16 %v237, %v236
  %v251 = vpack.c.bf16 %v239, %v238
  %v252 = vpack.c.bf16 %v241, %v240
  %v253 = vpack.c.bf16 %v243, %v242
  %v254 = vpack.c.bf16 %v245, %v244
  %v255 = vpack.c.bf16 %v247, %v246
  %v264 = vunpack.c.l.b16 %v248
  %v265 = vunpack.c.h.b16 %v248
  %v266 = vunpack.c.l.b16 %v249
  %v267 = vunpack.c.h.b16 %v249
  %v268 = vunpack.c.l.b16 %v250
  %v269 = vunpack.c.h.b16 %v250
  %v270 = vunpack.c.l.b16 %v251
  %v271 = vunpack.c.h.b16 %v251
  %v272 = vunpack.c.l.b16 %v252
  %v273 = vunpack.c.h.b16 %v252
  %v274 = vunpack.c.l.b16 %v253
  %v275 = vunpack.c.h.b16 %v253
  %v276 = vunpack.c.l.b16 %v254
  %v277 = vunpack.c.h.b16 %v254
  %v278 = vunpack.c.l.b16 %v255
  %v279 = vunpack.c.h.b16 %v255
  %v280 = vpack.c.b16 %v264, %v264
  %v281 = vpack.c.b16 %v265, %v265
  %v282 = vpack.c.b16 %v266, %v266
  %v283 = vpack.c.b16 %v267, %v267
  %v284 = vpack.c.b16 %v268, %v268
  %v285 = vpack.c.b16 %v269, %v269
  %v286 = vpack.c.b16 %v270, %v270
  %v287 = vpack.c.b16 %v271, %v271
  %v288 = vpack.c.b16 %v272, %v272
  %v289 = vpack.c.b16 %v273, %v273
  %v290 = vpack.c.b16 %v274, %v274
  %v291 = vpack.c.b16 %v275, %v275
  %v292 = vpack.c.b16 %v276, %v276
  %v293 = vpack.c.b16 %v277, %v277
  %v294 = vpack.c.b16 %v278, %v278
  %v295 = vpack.c.b16 %v279, %v279
  %vm312 = vcmask 125952
  %313 = vst.msk [vmem:[%s3] sm:$0xf] %vm312, %v280
  %314 = vst.msk [vmem:[%s3 + $0x4] sm:$0xf] %vm312, %v281
  %315 = vst.msk [vmem:[%s3 + $0x8] sm:$0xf] %vm312, %v282
  %316 = vst.msk [vmem:[%s3 + $0xc] sm:$0xf] %vm312, %v283
  %317 = vst.msk [vmem:[%s3 + $0x10] sm:$0xf] %vm312, %v284
  %318 = vst.msk [vmem:[%s3 + $0x14] sm:$0xf] %vm312, %v285
  %319 = vst.msk [vmem:[%s3 + $0x18] sm:$0xf] %vm312, %v286
  %320 = vst.msk [vmem:[%s3 + $0x1c] sm:$0xf] %vm312, %v287
  %321 = vst.msk [vmem:[%s3 + $0x20] sm:$0xf] %vm312, %v288
  %322 = vst.msk [vmem:[%s3 + $0x24] sm:$0xf] %vm312, %v289
  %323 = vst.msk [vmem:[%s3 + $0x28] sm:$0xf] %vm312, %v290
  %324 = vst.msk [vmem:[%s3 + $0x2c] sm:$0xf] %vm312, %v291
  %325 = vst.msk [vmem:[%s3 + $0x30] sm:$0xf] %vm312, %v292
  %326 = vst.msk [vmem:[%s3 + $0x34] sm:$0xf] %vm312, %v293
  %327 = vst.msk [vmem:[%s3 + $0x38] sm:$0xf] %vm312, %v294
  %328 = vst.msk [vmem:[%s3 + $0x3c] sm:$0xf] %vm312, %v295
  // Predicated region
  $region14: #{efficientvit_forward.6} parent=0 // pred_check
    _
  $region15: #{efficientvit_forward.6} parent=0 // pred_check_branch
    %330 = sbr.rel (0) target = $region17
  $region16: #{efficientvit_forward.6} parent=0 // pred_region
    _
  $region17: #{efficientvit_forward.6} parent=0 // pred_fallthru
    _
  // Predicated region
  $region18: #{efficientvit_forward.6} parent=0 // pred_check
    _
  $region19: #{efficientvit_forward.6} parent=0 // pred_check_branch
    %332 = sbr.rel (0) target = $region21
  $region20: #{efficientvit_forward.6} parent=0 // pred_region
    _
  $region21: #{efficientvit_forward.6} parent=0 // pred_fallthru
    _

// kernel: efficientvit_forward.7
$region0: #{efficientvit_forward.7}
  #allocation0 [shape = 'u32[]', space=smem, size = 0x4, offset = 0x4, fixed_abs, tag = 'smem constant byte address 0x4 - core index']
  #allocation1 [shape = 'u32[144,128]{1,0:T(1,128)}', space=vmem, size = 0x12000, scoped, tag = 'internal scratch']
  %s0 = inlined_call_operand.vmem [shape: bf16[32,64], index: 0, kind: input, shape index: {}]
  %s1 = inlined_call_operand.vmem [shape: bf16[64,32], index: 1, kind: input, shape index: {}]
  %s2 = inlined_call_operand.vmem [shape: f32[1,32], index: 2, kind: input, shape index: {}]
  %s3 = inlined_call_operand.vmem [shape: bf16[32,32], index: 3, kind: output, shape index: {}]
  %s4 = sld [smem:[#allocation0]]
  $region22: #{efficientvit_forward.7} parent=0
    _
  %s6 = ssub.s32 1, %s4
  %s7 = scalar_select 0, %s6, %s4
  // Predicated region
  $region2: #{efficientvit_forward.7} parent=0 // pred_check
    _
  $region3: #{efficientvit_forward.7} parent=0 // pred_check_branch
    %9 = sbr.rel (0) target = $region5
  $region4: #{efficientvit_forward.7} parent=0 // pred_region
    _
  $region5: #{efficientvit_forward.7} parent=0 // pred_fallthru
    _
  // Predicated region
  $region6: #{efficientvit_forward.7} parent=0 // pred_check
    _
  $region7: #{efficientvit_forward.7} parent=0 // pred_check_branch
    %11 = sbr.rel (0) target = $region9
  $region8: #{efficientvit_forward.7} parent=0 // pred_region
    _
  $region9: #{efficientvit_forward.7} parent=0 // pred_fallthru
    _
  // Predicated region
  $region10: #{efficientvit_forward.7} parent=0 // pred_check
    _
  $region11: #{efficientvit_forward.7} parent=0 // pred_check_branch
    %13 = sbr.rel (0) target = $region13
  $region12: #{efficientvit_forward.7} parent=0 // pred_region
    _
  $region13: #{efficientvit_forward.7} parent=0 // pred_fallthru
    _
  %v15 = vld [vmem:[%s0] sm:$0xf]
  %v16 = vld [vmem:[%s0 + $0x4] sm:$0xf]
  %v17 = vld [vmem:[%s0 + $0x8] sm:$0xf]
  %v18 = vld [vmem:[%s0 + $0xc] sm:$0xf]
  %v19 = vld [vmem:[%s1] sm:$0xf]
  %v20 = vld [vmem:[%s1 + $0x4] sm:$0xf]
  %v21 = vld [vmem:[%s1 + $0x8] sm:$0xf]
  %v22 = vld [vmem:[%s1 + $0xc] sm:$0xf]
  %v23 = vld [vmem:[%s1 + $0x10] sm:$0xf]
  %v24 = vld [vmem:[%s1 + $0x14] sm:$0xf]
  %v25 = vld [vmem:[%s1 + $0x18] sm:$0xf]
  %v26 = vld [vmem:[%s1 + $0x1c] sm:$0xf]
  %v27 = vld [vmem:[%s2] sm:$0x1]
  %v29 = vlaneseq
  %v30 = vshrl.u32 %v29, 7
  %v31 = vsub.s32 0, %v30
  %v32 = vrot.slane %v27, %v31
  %v38 = vunpack.c.l.b16 %v15
  %v39 = vunpack.c.l.b16 %v16
  %v40 = vunpack.c.l.b16 %v17
  %v41 = vunpack.c.l.b16 %v18
  %v42 = vpack.c.b16 %v39, %v38
  %v43 = vpack.c.b16 %v41, %v40
  %v52 = vunpack.c.l.b16 %v19
  %v53 = vunpack.c.l.b16 %v20
  %v54 = vunpack.c.l.b16 %v21
  %v55 = vunpack.c.l.b16 %v22
  %v56 = vunpack.c.l.b16 %v23
  %v57 = vunpack.c.l.b16 %v24
  %v58 = vunpack.c.l.b16 %v25
  %v59 = vunpack.c.l.b16 %v26
  %v60 = vpack.c.b16 %v53, %v52
  %v61 = vpack.c.b16 %v55, %v54
  %v62 = vpack.c.b16 %v57, %v56
  %v63 = vpack.c.b16 %v59, %v58
  %vm68 = vcmask 523264
  %v70 = vsel %vm68, %v42, 0
  %v73 = vsel %vm68, %v43, 0
  %75 = vmatprep.subr.bf16.mxu0 0
  %76 = vmatpush1.bf16.msra.mxu0 0
  %77 = vmatprep.subr.bf16.mxu0 0
  %78 = vmatpush1.bf16.msra.mxu0 0
  %79 = vmatprep.subr.bf16.mxu0 0
  %80 = vmatpush1.bf16.msra.mxu0 0
  %81 = vmatprep.subr.bf16.mxu0 0
  %82 = vmatpush1.bf16.msra.mxu0 0
  %83 = vmatprep.subr.bf16.mxu0 0
  %84 = vmatpush1.bf16.msra.mxu0 %v63
  %85 = vmatprep.subr.bf16.mxu0 0
  %86 = vmatpush1.bf16.msra.mxu0 %v62
  %87 = vmatprep.subr.bf16.mxu0 0
  %88 = vmatpush1.bf16.msra.mxu0 %v61
  %89 = vmatprep.subr.bf16.mxu0 0
  %90 = vmatpush1.bf16.msra.mxu0 %v60
  %91 = vmatprep.subr.bf16.mxu0 0
  %92 = vmatpush2.bf16.msra.mxu0 0
  %93 = vmatprep.subr.bf16.mxu0 0
  %94 = vmatpush2.bf16.msra.mxu0 0
  %95 = vmatprep.subr.bf16.mxu0 0
  %96 = vmatpush2.bf16.msra.mxu0 0
  %97 = vmatprep.subr.bf16.mxu0 0
  %98 = vmatpush2.bf16.msra.mxu0 0
  %99 = vmatprep.subr.bf16.mxu0 0
  %100 = vmatpush2.bf16.msra.mxu0 0
  %101 = vmatprep.subr.bf16.mxu0 0
  %102 = vmatpush2.bf16.msra.mxu0 0
  %103 = vmatprep.subr.bf16.mxu0 0
  %104 = vmatpush2.bf16.msra.mxu0 0
  %105 = vmatprep.subr.bf16.mxu0 0
  %106 = vmatpush2.bf16.msra.mxu0 0
  %107 = vmatprep.mubr.bf16.mxu0 0
  %108 = vmatmul.mubr.bf16.gmra.mxu0 %v70
  %v109 = vpop.f32.mrf.mxu0
  %v110 = vadd.f32 %v32, %v109
  %v111 = vpop.f32.mrf.mxu0
  %v112 = vpop.f32.mrf.mxu0
  %v113 = vadd.f32 %v32, %v112
  %v114 = vpop.f32.mrf.mxu0
  %115 = vmatprep.mubr.bf16.mxu0 0
  %116 = vmatmul.mubr.bf16.gmra.mxu0 %v73
  %v117 = vpop.f32.mrf.mxu0
  %v118 = vadd.f32 %v32, %v117
  %v119 = vpop.f32.mrf.mxu0
  %v120 = vpop.f32.mrf.mxu0
  %v121 = vadd.f32 %v32, %v120
  %v122 = vpop.f32.mrf.mxu0
  %123 = vdwg.mxu0
  %v124 = vmax.f32 %v110, 0.0
  %v125 = vmax.f32 %v113, 0.0
  %v126 = vmax.f32 %v118, 0.0
  %v127 = vmax.f32 %v121, 0.0
  %v128 = vpack.c.bf16 %v125, %v124
  %v129 = vpack.c.bf16 %v127, %v126
  %v132 = vunpack.c.l.b16 %v128
  %v133 = vunpack.c.h.b16 %v128
  %v134 = vunpack.c.l.b16 %v129
  %v135 = vunpack.c.h.b16 %v129
  %v136 = vpack.c.b16 %v132, %v132
  %v137 = vpack.c.b16 %v133, %v133
  %v138 = vpack.c.b16 %v134, %v134
  %v139 = vpack.c.b16 %v135, %v135
  %vm144 = vcmask 257024
  %145 = vst.msk [vmem:[%s3] sm:$0xf] %vm144, %v136
  %146 = vst.msk [vmem:[%s3 + $0x4] sm:$0xf] %vm144, %v137
  %147 = vst.msk [vmem:[%s3 + $0x8] sm:$0xf] %vm144, %v138
  %148 = vst.msk [vmem:[%s3 + $0xc] sm:$0xf] %vm144, %v139
  // Predicated region
  $region14: #{efficientvit_forward.7} parent=0 // pred_check
    _
  $region15: #{efficientvit_forward.7} parent=0 // pred_check_branch
    %150 = sbr.rel (0) target = $region17
  $region16: #{efficientvit_forward.7} parent=0 // pred_region
    _
  $region17: #{efficientvit_forward.7} parent=0 // pred_fallthru
    _
  // Predicated region
  $region18: #{efficientvit_forward.7} parent=0 // pred_check
    _
  $region19: #{efficientvit_forward.7} parent=0 // pred_check_branch
    %152 = sbr.rel (0) target = $region21
  $region20: #{efficientvit_forward.7} parent=0 // pred_region
    _
  $region21: #{efficientvit_forward.7} parent=0 // pred_fallthru
    _

// kernel: efficientvit_forward.8
$region0: #{efficientvit_forward.8}
  #allocation0 [shape = 'u32[]', space=smem, size = 0x4, offset = 0x4, fixed_abs, tag = 'smem constant byte address 0x4 - core index']
  #allocation1 [shape = 'u32[144,128]{1,0:T(1,128)}', space=vmem, size = 0x12000, scoped, tag = 'internal scratch']
  %s0 = inlined_call_operand.vmem [shape: bf16[8,128], index: 0, kind: input, shape index: {}]
  %s1 = inlined_call_operand.vmem [shape: bf16[128,64], index: 1, kind: input, shape index: {}]
  %s2 = inlined_call_operand.vmem [shape: f32[1,64], index: 2, kind: input, shape index: {}]
  %s3 = inlined_call_operand.vmem [shape: bf16[8,64], index: 3, kind: output, shape index: {}]
  %s4 = sld [smem:[#allocation0]]
  $region22: #{efficientvit_forward.8} parent=0
    _
  %s6 = ssub.s32 1, %s4
  %s7 = scalar_select 0, %s6, %s4
  // Predicated region
  $region2: #{efficientvit_forward.8} parent=0 // pred_check
    _
  $region3: #{efficientvit_forward.8} parent=0 // pred_check_branch
    %9 = sbr.rel (0) target = $region5
  $region4: #{efficientvit_forward.8} parent=0 // pred_region
    _
  $region5: #{efficientvit_forward.8} parent=0 // pred_fallthru
    _
  // Predicated region
  $region6: #{efficientvit_forward.8} parent=0 // pred_check
    _
  $region7: #{efficientvit_forward.8} parent=0 // pred_check_branch
    %11 = sbr.rel (0) target = $region9
  $region8: #{efficientvit_forward.8} parent=0 // pred_region
    _
  $region9: #{efficientvit_forward.8} parent=0 // pred_fallthru
    _
  // Predicated region
  $region10: #{efficientvit_forward.8} parent=0 // pred_check
    _
  $region11: #{efficientvit_forward.8} parent=0 // pred_check_branch
    %13 = sbr.rel (0) target = $region13
  $region12: #{efficientvit_forward.8} parent=0 // pred_region
    _
  $region13: #{efficientvit_forward.8} parent=0 // pred_fallthru
    _
  %v15 = vld [vmem:[%s0] sm:$0xf]
  %v16 = vld [vmem:[%s1] sm:$0xf]
  %v17 = vld [vmem:[%s1 + $0x4] sm:$0xf]
  %v18 = vld [vmem:[%s1 + $0x8] sm:$0xf]
  %v19 = vld [vmem:[%s1 + $0xc] sm:$0xf]
  %v20 = vld [vmem:[%s1 + $0x10] sm:$0xf]
  %v21 = vld [vmem:[%s1 + $0x14] sm:$0xf]
  %v22 = vld [vmem:[%s1 + $0x18] sm:$0xf]
  %v23 = vld [vmem:[%s1 + $0x1c] sm:$0xf]
  %v24 = vld [vmem:[%s1 + $0x20] sm:$0xf]
  %v25 = vld [vmem:[%s1 + $0x24] sm:$0xf]
  %v26 = vld [vmem:[%s1 + $0x28] sm:$0xf]
  %v27 = vld [vmem:[%s1 + $0x2c] sm:$0xf]
  %v28 = vld [vmem:[%s1 + $0x30] sm:$0xf]
  %v29 = vld [vmem:[%s1 + $0x34] sm:$0xf]
  %v30 = vld [vmem:[%s1 + $0x38] sm:$0xf]
  %v31 = vld [vmem:[%s1 + $0x3c] sm:$0xf]
  %v32 = vld [vmem:[%s2] sm:$0x1]
  %v34 = vlaneseq
  %v35 = vshrl.u32 %v34, 7
  %v36 = vsub.s32 0, %v35
  %v37 = vrot.slane %v32, %v36
  %v55 = vunpack.c.l.b16 %v16
  %v56 = vunpack.c.l.b16 %v17
  %v57 = vunpack.c.l.b16 %v18
  %v58 = vunpack.c.l.b16 %v19
  %v59 = vunpack.c.l.b16 %v20
  %v60 = vunpack.c.l.b16 %v21
  %v61 = vunpack.c.l.b16 %v22
  %v62 = vunpack.c.l.b16 %v23
  %v63 = vunpack.c.l.b16 %v24
  %v64 = vunpack.c.l.b16 %v25
  %v65 = vunpack.c.l.b16 %v26
  %v66 = vunpack.c.l.b16 %v27
  %v67 = vunpack.c.l.b16 %v28
  %v68 = vunpack.c.l.b16 %v29
  %v69 = vunpack.c.l.b16 %v30
  %v70 = vunpack.c.l.b16 %v31
  %v71 = vpack.c.b16 %v56, %v55
  %v72 = vpack.c.b16 %v58, %v57
  %v73 = vpack.c.b16 %v60, %v59
  %v74 = vpack.c.b16 %v62, %v61
  %v75 = vpack.c.b16 %v64, %v63
  %v76 = vpack.c.b16 %v66, %v65
  %v77 = vpack.c.b16 %v68, %v67
  %v78 = vpack.c.b16 %v70, %v69
  %87 = vmatprep.subr.bf16.mxu0 0
  %88 = vmatpush1.bf16.msra.mxu0 %v78
  %89 = vmatprep.subr.bf16.mxu0 0
  %90 = vmatpush1.bf16.msra.mxu0 %v77
  %91 = vmatprep.subr.bf16.mxu0 0
  %92 = vmatpush1.bf16.msra.mxu0 %v76
  %93 = vmatprep.subr.bf16.mxu0 0
  %94 = vmatpush1.bf16.msra.mxu0 %v75
  %95 = vmatprep.subr.bf16.mxu0 0
  %96 = vmatpush1.bf16.msra.mxu0 %v74
  %97 = vmatprep.subr.bf16.mxu0 0
  %98 = vmatpush1.bf16.msra.mxu0 %v73
  %99 = vmatprep.subr.bf16.mxu0 0
  %100 = vmatpush1.bf16.msra.mxu0 %v72
  %101 = vmatprep.subr.bf16.mxu0 0
  %102 = vmatpush1.bf16.msra.mxu0 %v71
  %103 = vmatprep.subr.bf16.mxu0 0
  %104 = vmatpush2.bf16.msra.mxu0 0
  %105 = vmatprep.subr.bf16.mxu0 0
  %106 = vmatpush2.bf16.msra.mxu0 0
  %107 = vmatprep.subr.bf16.mxu0 0
  %108 = vmatpush2.bf16.msra.mxu0 0
  %109 = vmatprep.subr.bf16.mxu0 0
  %110 = vmatpush2.bf16.msra.mxu0 0
  %111 = vmatprep.subr.bf16.mxu0 0
  %112 = vmatpush2.bf16.msra.mxu0 0
  %113 = vmatprep.subr.bf16.mxu0 0
  %114 = vmatpush2.bf16.msra.mxu0 0
  %115 = vmatprep.subr.bf16.mxu0 0
  %116 = vmatpush2.bf16.msra.mxu0 0
  %117 = vmatprep.subr.bf16.mxu0 0
  %118 = vmatpush2.bf16.msra.mxu0 0
  %119 = vmatprep.mubr.bf16.mxu0 0
  %120 = vmatmul.mubr.bf16.gmra.mxu0 %v15
  %v121 = vpop.f32.mrf.mxu0
  %v122 = vadd.f32 %v37, %v121
  %v123 = vpop.f32.mrf.mxu0
  %v124 = vpop.f32.mrf.mxu0
  %v125 = vpop.f32.mrf.mxu0
  %126 = vdwg.mxu0
  %v127 = vmax.f32 %v122, 0.0
  %v128 = vpack.c.bf16 %v127, %v127
  %vm129 = vcmask 519168
  %130 = vst.msk [vmem:[%s3] sm:$0xf] %vm129, %v128
  // Predicated region
  $region14: #{efficientvit_forward.8} parent=0 // pred_check
    _
  $region15: #{efficientvit_forward.8} parent=0 // pred_check_branch
    %132 = sbr.rel (0) target = $region17
  $region16: #{efficientvit_forward.8} parent=0 // pred_region
    _
  $region17: #{efficientvit_forward.8} parent=0 // pred_fallthru
    _
  // Predicated region
  $region18: #{efficientvit_forward.8} parent=0 // pred_check
    _
  $region19: #{efficientvit_forward.8} parent=0 // pred_check_branch
    %134 = sbr.rel (0) target = $region21
  $region20: #{efficientvit_forward.8} parent=0 // pred_region
    _
  $region21: #{efficientvit_forward.8} parent=0 // pred_fallthru
    _

// kernel: efficientvit_forward.9
$region0: #{efficientvit_forward.9}
  #allocation0 [shape = 'u32[]', space=smem, size = 0x4, offset = 0x4, fixed_abs, tag = 'smem constant byte address 0x4 - core index']
  #allocation1 [shape = 'u32[144,128]{1,0:T(1,128)}', space=vmem, size = 0x12000, scoped, tag = 'internal scratch']
  %s0 = inlined_call_operand.vmem [shape: bf16[2,8,128], index: 0, kind: input, shape index: {}]
  %s1 = inlined_call_operand.vmem [shape: bf16[2,4,128], index: 1, kind: input, shape index: {}]
  %s2 = inlined_call_operand.vmem [shape: bf16[2,2,128], index: 2, kind: input, shape index: {}]
  %s3 = inlined_call_operand.vmem [shape: bf16[2,8], index: 3, kind: input, shape index: {}]
  %s4 = inlined_call_operand.vmem [shape: bf16[2,4], index: 4, kind: input, shape index: {}]
  %s5 = inlined_call_operand.vmem [shape: bf16[2,2], index: 5, kind: input, shape index: {}]
  %s6 = inlined_call_operand.vmem [shape: bf16[2,2,128], index: 6, kind: output, shape index: {0}]
  %s7 = inlined_call_operand.vmem [shape: bf16[2,2,128], index: 7, kind: output, shape index: {1}]
  %s8 = inlined_call_operand.vmem [shape: bf16[2,2,128], index: 8, kind: output, shape index: {2}]
  %9 = xla_tuple %s6, %s7, %s8
  %s10 = sld [smem:[#allocation0]]
  $region73: #{efficientvit_forward.9} parent=0
    _
  %s12 = ssub.s32 1, %s10
  %s13 = scalar_select 0, %s12, %s10
  loop: start=0, step=1, limit=4
  $region2: #{efficientvit_forward.9} parent=0 // loop_pre_header
    _
  $region3: #{efficientvit_forward.9} parent=0 // loop_header
    %s15 = sphi 0, %s19
    %p16 = scmp.ge.s32.totalorder %s15, 4
    %s25 = sphi 0, %s27
    %s28 = sphi 0, %s25
    %s29 = sphi 0, %s28
    %s45 = sphi 0, %s29
    %s51 = sphi 0, %s53
    %s54 = sphi 0, %s51
    %s55 = sphi 0, %s54
    %s71 = sphi 0, %s55
    %s77 = sphi 0, %s79
    %s80 = sphi 0, %s77
    %s81 = sphi 0, %s80
    %s97 = sphi 0, %s81
    %s101 = sphi 0, %s101
    %s103 = sphi 0, %s101
    %s104 = sphi 0, %s103
    %s118 = sphi 0, %s104
    %s122 = sphi 0, %s122
    %s124 = sphi 0, %s122
    %s125 = sphi 0, %s124
    %s139 = sphi 0, %s125
    %s143 = sphi 0, %s143
    %s145 = sphi 0, %s143
    %s146 = sphi 0, %s145
    %s160 = sphi 0, %s146
    %s166 = sphi 0, %s168
    %s169 = sphi 0, %s166
    %s170 = sphi 0, %s169
    %s186 = sphi 0, %s170
    %s192 = sphi 0, %s194
    %s195 = sphi 0, %s192
    %s196 = sphi 0, %s195
    %s212 = sphi 0, %s196
    %s218 = sphi 0, %s220
    %s221 = sphi 0, %s218
    %s222 = sphi 0, %s221
    %s238 = sphi 0, %s222
  $region4: #{efficientvit_forward.9} parent=0 // loop_header_branch
    %18 = sbr.rel (%p16) target = $region8
  $region5: #{efficientvit_forward.9} parent=0 // loop_body
    %s20 = ssub.s32 %s15, 1
    %s21 = ssub.s32 %s15, 2
    %s22 = sadd.s32 %s15, 1
    %s23 = ssub.s32 %s15, %s22
    %p24 = scmp.eq.s32.totalorder %s23, 0
    %s26 = sadd.s32 %s25, 1
    %s27 = scalar_select %p24, %s25, %s26
    %p30 = pneg %p24
    %p31 = scmp.eq.s32.totalorder %s15, 1
    %p32 = por %p30, %p31
    %p33 = scmp.ne.s32.totalorder %s25, %s28
    %p34 = scmp.eq.s32.totalorder %s15, 0
    %p35 = por %p33, %p34
    %p36 = scmp.ne.s32.totalorder %s25, %s28
    %p37 = scmp.eq.s32.totalorder %s20, 1
    %p38 = por %p36, %p37
    %p39 = scmp.ne.s32.totalorder %s28, %s29
    %p40 = scmp.eq.s32.totalorder %s20, 0
    %p41 = por %p39, %p40
    %p42 = scmp.ne.s32.totalorder %s28, %s29
    %p43 = scmp.eq.s32.totalorder %s21, 1
    %p44 = por %p42, %p43
    %p46 = scmp.ne.s32.totalorder %s29, %s45
    %p47 = scmp.eq.s32.totalorder %s21, 0
    %p48 = por %p46, %p47
    %s49 = ssub.s32 %s15, %s22
    %p50 = scmp.eq.s32.totalorder %s49, 0
    %s52 = sadd.s32 %s51, 1
    %s53 = scalar_select %p50, %s51, %s52
    %p56 = pneg %p50
    %p57 = scmp.eq.s32.totalorder %s15, 1
    %p58 = por %p56, %p57
    %p59 = scmp.ne.s32.totalorder %s51, %s54
    %p60 = scmp.eq.s32.totalorder %s15, 0
    %p61 = por %p59, %p60
    %p62 = scmp.ne.s32.totalorder %s51, %s54
    %p63 = scmp.eq.s32.totalorder %s20, 1
    %p64 = por %p62, %p63
    %p65 = scmp.ne.s32.totalorder %s54, %s55
    %p66 = scmp.eq.s32.totalorder %s20, 0
    %p67 = por %p65, %p66
    %p68 = scmp.ne.s32.totalorder %s54, %s55
    %p69 = scmp.eq.s32.totalorder %s21, 1
    %p70 = por %p68, %p69
    %p72 = scmp.ne.s32.totalorder %s55, %s71
    %p73 = scmp.eq.s32.totalorder %s21, 0
    %p74 = por %p72, %p73
    %s75 = ssub.s32 %s15, %s22
    %p76 = scmp.eq.s32.totalorder %s75, 0
    %s78 = sadd.s32 %s77, 1
    %s79 = scalar_select %p76, %s77, %s78
    %p82 = pneg %p76
    %p83 = scmp.eq.s32.totalorder %s15, 1
    %p84 = por %p82, %p83
    %p85 = scmp.ne.s32.totalorder %s77, %s80
    %p86 = scmp.eq.s32.totalorder %s15, 0
    %p87 = por %p85, %p86
    %p88 = scmp.ne.s32.totalorder %s77, %s80
    %p89 = scmp.eq.s32.totalorder %s20, 1
    %p90 = por %p88, %p89
    %p91 = scmp.ne.s32.totalorder %s80, %s81
    %p92 = scmp.eq.s32.totalorder %s20, 0
    %p93 = por %p91, %p92
    %p94 = scmp.ne.s32.totalorder %s80, %s81
    %p95 = scmp.eq.s32.totalorder %s21, 1
    %p96 = por %p94, %p95
    %p98 = scmp.ne.s32.totalorder %s81, %s97
    %p99 = scmp.eq.s32.totalorder %s21, 0
    %p100 = por %p98, %p99
    %s102 = sadd.s32 %s101, 1
    %p105 = scmp.eq.s32.totalorder %s15, 1
    %p106 = scmp.ne.s32.totalorder %s101, %s103
    %p107 = scmp.eq.s32.totalorder %s15, 0
    %p108 = por %p106, %p107
    %p109 = scmp.ne.s32.totalorder %s101, %s103
    %p110 = scmp.eq.s32.totalorder %s20, 1
    %p111 = por %p109, %p110
    %p112 = scmp.ne.s32.totalorder %s103, %s104
    %p113 = scmp.eq.s32.totalorder %s20, 0
    %p114 = por %p112, %p113
    %p115 = scmp.ne.s32.totalorder %s103, %s104
    %p116 = scmp.eq.s32.totalorder %s21, 1
    %p117 = por %p115, %p116
    %p119 = scmp.ne.s32.totalorder %s104, %s118
    %p120 = scmp.eq.s32.totalorder %s21, 0
    %p121 = por %p119, %p120
    %s123 = sadd.s32 %s122, 1
    %p126 = scmp.eq.s32.totalorder %s15, 1
    %p127 = scmp.ne.s32.totalorder %s122, %s124
    %p128 = scmp.eq.s32.totalorder %s15, 0
    %p129 = por %p127, %p128
    %p130 = scmp.ne.s32.totalorder %s122, %s124
    %p131 = scmp.eq.s32.totalorder %s20, 1
    %p132 = por %p130, %p131
    %p133 = scmp.ne.s32.totalorder %s124, %s125
    %p134 = scmp.eq.s32.totalorder %s20, 0
    %p135 = por %p133, %p134
    %p136 = scmp.ne.s32.totalorder %s124, %s125
    %p137 = scmp.eq.s32.totalorder %s21, 1
    %p138 = por %p136, %p137
    %p140 = scmp.ne.s32.totalorder %s125, %s139
    %p141 = scmp.eq.s32.totalorder %s21, 0
    %p142 = por %p140, %p141
    %s144 = sadd.s32 %s143, 1
    %p147 = scmp.eq.s32.totalorder %s15, 1
    %p148 = scmp.ne.s32.totalorder %s143, %s145
    %p149 = scmp.eq.s32.totalorder %s15, 0
    %p150 = por %p148, %p149
    %p151 = scmp.ne.s32.totalorder %s143, %s145
    %p152 = scmp.eq.s32.totalorder %s20, 1
    %p153 = por %p151, %p152
    %p154 = scmp.ne.s32.totalorder %s145, %s146
    %p155 = scmp.eq.s32.totalorder %s20, 0
    %p156 = por %p154, %p155
    %p157 = scmp.ne.s32.totalorder %s145, %s146
    %p158 = scmp.eq.s32.totalorder %s21, 1
    %p159 = por %p157, %p158
    %p161 = scmp.ne.s32.totalorder %s146, %s160
    %p162 = scmp.eq.s32.totalorder %s21, 0
    %p163 = por %p161, %p162
    %s164 = ssub.s32 %s15, %s22
    %p165 = scmp.eq.s32.totalorder %s164, 0
    %s167 = sadd.s32 %s166, 1
    %s168 = scalar_select %p165, %s166, %s167
    %p171 = pneg %p165
    %p172 = scmp.eq.s32.totalorder %s15, 1
    %p173 = por %p171, %p172
    %p174 = scmp.ne.s32.totalorder %s166, %s169
    %p175 = scmp.eq.s32.totalorder %s15, 0
    %p176 = por %p174, %p175
    %p177 = scmp.ne.s32.totalorder %s166, %s169
    %p178 = scmp.eq.s32.totalorder %s20, 1
    %p179 = por %p177, %p178
    %p180 = scmp.ne.s32.totalorder %s169, %s170
    %p181 = scmp.eq.s32.totalorder %s20, 0
    %p182 = por %p180, %p181
    %p183 = scmp.ne.s32.totalorder %s169, %s170
    %p184 = scmp.eq.s32.totalorder %s21, 1
    %p185 = por %p183, %p184
    %p187 = scmp.ne.s32.totalorder %s170, %s186
    %p188 = scmp.eq.s32.totalorder %s21, 0
    %p189 = por %p187, %p188
    %s190 = ssub.s32 %s15, %s22
    %p191 = scmp.eq.s32.totalorder %s190, 0
    %s193 = sadd.s32 %s192, 1
    %s194 = scalar_select %p191, %s192, %s193
    %p197 = pneg %p191
    %p198 = scmp.eq.s32.totalorder %s15, 1
    %p199 = por %p197, %p198
    %p200 = scmp.ne.s32.totalorder %s192, %s195
    %p201 = scmp.eq.s32.totalorder %s15, 0
    %p202 = por %p200, %p201
    %p203 = scmp.ne.s32.totalorder %s192, %s195
    %p204 = scmp.eq.s32.totalorder %s20, 1
    %p205 = por %p203, %p204
    %p206 = scmp.ne.s32.totalorder %s195, %s196
    %p207 = scmp.eq.s32.totalorder %s20, 0
    %p208 = por %p206, %p207
    %p209 = scmp.ne.s32.totalorder %s195, %s196
    %p210 = scmp.eq.s32.totalorder %s21, 1
    %p211 = por %p209, %p210
    %p213 = scmp.ne.s32.totalorder %s196, %s212
    %p214 = scmp.eq.s32.totalorder %s21, 0
    %p215 = por %p213, %p214
    %s216 = ssub.s32 %s15, %s22
    %p217 = scmp.eq.s32.totalorder %s216, 0
    %s219 = sadd.s32 %s218, 1
    %s220 = scalar_select %p217, %s218, %s219
    %p223 = pneg %p217
    %p224 = scmp.eq.s32.totalorder %s15, 1
    %p225 = por %p223, %p224
    %p226 = scmp.ne.s32.totalorder %s218, %s221
    %p227 = scmp.eq.s32.totalorder %s15, 0
    %p228 = por %p226, %p227
    %p229 = scmp.ne.s32.totalorder %s218, %s221
    %p230 = scmp.eq.s32.totalorder %s20, 1
    %p231 = por %p229, %p230
    %p232 = scmp.ne.s32.totalorder %s221, %s222
    %p233 = scmp.eq.s32.totalorder %s20, 0
    %p234 = por %p232, %p233
    %p235 = scmp.ne.s32.totalorder %s221, %s222
    %p236 = scmp.eq.s32.totalorder %s21, 1
    %p237 = por %p235, %p236
    %p239 = scmp.ne.s32.totalorder %s222, %s238
    %p240 = scmp.eq.s32.totalorder %s21, 0
    %p241 = por %p239, %p240
    %p242 = scmp.le.s32.totalorder 1, %s15
    %p243 = scmp.lt.s32.totalorder %s15, 3
    %p244 = pnand %p242, %p243
    %p245 = pneg %p244
    // Predicated region
    $region9: #{efficientvit_forward.9} parent=5 // pred_check
      _
    $region10: #{efficientvit_forward.9} parent=5 // pred_check_branch
      %247 = sbr.rel (%p244) target = $region12
    $region11: #{efficientvit_forward.9} parent=5 // pred_region
      %s248 = ssub.s32 %s15, 1
      // Predicated region
      $region13: #{efficientvit_forward.9} parent=11 // pred_check
        %p249 = pneg %p114
      $region14: #{efficientvit_forward.9} parent=11 // pred_check_branch
        %251 = sbr.rel (%p249) target = $region16
      $region15: #{efficientvit_forward.9} parent=11 // pred_region
        _
      $region16: #{efficientvit_forward.9} parent=11 // pred_fallthru
        _
      // Predicated region
      $region17: #{efficientvit_forward.9} parent=11 // pred_check
        %p252 = pneg %p135
      $region18: #{efficientvit_forward.9} parent=11 // pred_check_branch
        %254 = sbr.rel (%p252) target = $region20
      $region19: #{efficientvit_forward.9} parent=11 // pred_region
        _
      $region20: #{efficientvit_forward.9} parent=11 // pred_fallthru
        _
      // Predicated region
      $region21: #{efficientvit_forward.9} parent=11 // pred_check
        %p255 = pneg %p156
      $region22: #{efficientvit_forward.9} parent=11 // pred_check_branch
        %257 = sbr.rel (%p255) target = $region24
      $region23: #{efficientvit_forward.9} parent=11 // pred_region
        _
      $region24: #{efficientvit_forward.9} parent=11 // pred_fallthru
        _
    $region12: #{efficientvit_forward.9} parent=5 // pred_fallthru
      _
    %p258 = scmp.lt.s32.totalorder %s15, 2
    // Predicated region
    $region25: #{efficientvit_forward.9} parent=5 // pred_check
      %p259 = pneg %p258
    $region26: #{efficientvit_forward.9} parent=5 // pred_check_branch
      %261 = sbr.rel (%p259) target = $region28
    $region27: #{efficientvit_forward.9} parent=5 // pred_region
      // Predicated region
      $region29: #{efficientvit_forward.9} parent=27 // pred_check
        %p262 = pneg %p35
      $region30: #{efficientvit_forward.9} parent=27 // pred_check_branch
        %264 = sbr.rel (%p262) target = $region32
      $region31: #{efficientvit_forward.9} parent=27 // pred_region
        %p265 = scmp.lt.s32.totalorder %s15, 1
        %s266 = scalar_select %p265, %s15, 1
        %s267 = smul.addr %s266, 4
        %s268 = scalar_lea.vmem %s0, %s267
      $region32: #{efficientvit_forward.9} parent=27 // pred_fallthru
        _
      // Predicated region
      $region33: #{efficientvit_forward.9} parent=27 // pred_check
        %p269 = pneg %p61
      $region34: #{efficientvit_forward.9} parent=27 // pred_check_branch
        %271 = sbr.rel (%p269) target = $region36
      $region35: #{efficientvit_forward.9} parent=27 // pred_region
        %p272 = scmp.lt.s32.totalorder %s15, 1
        %s273 = scalar_select %p272, %s15, 1
        %s274 = smul.addr %s273, 2
        %s275 = scalar_lea.vmem %s1, %s274
      $region36: #{efficientvit_forward.9} parent=27 // pred_fallthru
        _
      // Predicated region
      $region37: #{efficientvit_forward.9} parent=27 // pred_check
        %p276 = pneg %p87
      $region38: #{efficientvit_forward.9} parent=27 // pred_check_branch
        %278 = sbr.rel (%p276) target = $region40
      $region39: #{efficientvit_forward.9} parent=27 // pred_region
        %p279 = scmp.lt.s32.totalorder %s15, 1
        %s280 = scalar_select %p279, %s15, 1
        %s281 = scalar_lea.vmem %s2, %s280
      $region40: #{efficientvit_forward.9} parent=27 // pred_fallthru
        _
    $region28: #{efficientvit_forward.9} parent=5 // pred_fallthru
      _
    %p282 = scmp.le.s32.totalorder 1, %s15
    %p283 = scmp.lt.s32.totalorder %s15, 3
    %p284 = pnand %p282, %p283
    %p285 = pneg %p284
    // Predicated region
    $region41: #{efficientvit_forward.9} parent=5 // pred_check
      _
    $region42: #{efficientvit_forward.9} parent=5 // pred_check_branch
      %287 = sbr.rel (%p284) target = $region44
    $region43: #{efficientvit_forward.9} parent=5 // pred_region
      %s288 = ssub.s32 %s15, 1
      %p289 = scmp.lt.s32.totalorder %s20, 1
      %s290 = scalar_select %p289, %s20, 1
      %s291 = smul.addr %s290, 4
      %s292 = scalar_lea.vmem %s0, %s291
      %p293 = pneg %p41
      %p294 = pneg %p38
      %p295 = scmp.lt.s32.totalorder %s20, 1
      %s296 = scalar_select %p295, %s20, 1
      %s297 = smul.addr %s296, 2
      %s298 = scalar_lea.vmem %s1, %s297
      %p299 = pneg %p67
      %p300 = pneg %p64
      %p301 = scmp.lt.s32.totalorder %s20, 1
      %s302 = scalar_select %p301, %s20, 1
      %s303 = scalar_lea.vmem %s2, %s302
      %p304 = pneg %p93
      %p305 = pneg %p90
      %p306 = pneg %p114
      %p307 = pneg %p111
      %p308 = pneg %p135
      %p309 = pneg %p132
      %p310 = pneg %p156
      %p311 = pneg %p153
      %p312 = pneg %p182
      %p313 = pneg %p179
      %p314 = scmp.lt.s32.totalorder %s20, 1
      %s315 = scalar_select %p314, %s20, 1
      %s316 = scalar_lea.vmem %s6, %s315
      %p317 = pneg %p208
      %p318 = pneg %p205
      %p319 = scmp.lt.s32.totalorder %s20, 1
      %s320 = scalar_select %p319, %s20, 1
      %s321 = scalar_lea.vmem %s7, %s320
      %p322 = pneg %p234
      %p323 = pneg %p231
      %p324 = scmp.lt.s32.totalorder %s20, 1
      %s325 = scalar_select %p324, %s20, 1
      %s326 = scalar_lea.vmem %s8, %s325
      %p327 = scmp.lt.s32.totalorder %s20, 1
      %s328 = scalar_select %p327, %s20, 1
      %s329 = smul.addr %s328, 4
      %s330 = scalar_lea.vmem %s0, %s329
      %p331 = scmp.lt.s32.totalorder %s20, 1
      %s332 = scalar_select %p331, %s20, 1
      %s333 = smul.addr %s332, 2
      %s334 = scalar_lea.vmem %s1, %s333
      %p335 = scmp.lt.s32.totalorder %s20, 1
      %s336 = scalar_select %p335, %s20, 1
      %s337 = scalar_lea.vmem %s2, %s336
      %p338 = scmp.lt.s32.totalorder %s20, 1
      %s339 = scalar_select %p338, %s20, 1
      %s340 = scalar_lea.vmem %s6, %s339
      %p341 = scmp.lt.s32.totalorder %s20, 1
      %s342 = scalar_select %p341, %s20, 1
      %s343 = scalar_lea.vmem %s7, %s342
      %p344 = scmp.lt.s32.totalorder %s20, 1
      %s345 = scalar_select %p344, %s20, 1
      %s346 = scalar_lea.vmem %s8, %s345
      %v348 = vld [vmem:[%s3] sm:$0x1]
      %v349 = vld [vmem:[%s330] sm:$0xf]
      %vm350 = vcmask 64512
      %v352 = vsel %vm350, %v348, 0
      %vm354 = vcmask 1043456
      %v356 = vsel %vm354, %v349, 0
      %358 = vmatprep.subr.bf16.mxu0 0
      %359 = vmatpush1.bf16.msra.mxu0 0
      %360 = vmatprep.subr.bf16.mxu0 0
      %361 = vmatpush1.bf16.msra.mxu0 0
      %362 = vmatprep.subr.bf16.mxu0 0
      %363 = vmatpush1.bf16.msra.mxu0 0
      %364 = vmatprep.subr.bf16.mxu0 0
      %365 = vmatpush1.bf16.msra.mxu0 0
      %366 = vmatprep.subr.bf16.mxu0 0
      %367 = vmatpush1.bf16.msra.mxu0 0
      %368 = vmatprep.subr.bf16.mxu0 0
      %369 = vmatpush1.bf16.msra.mxu0 0
      %370 = vmatprep.subr.bf16.mxu0 0
      %371 = vmatpush1.bf16.msra.mxu0 0
      %372 = vmatprep.subr.bf16.mxu0 0
      %373 = vmatpush1.bf16.msra.mxu0 %v356
      %374 = vmatprep.subr.bf16.mxu0 0
      %375 = vmatpush2.bf16.msra.mxu0 0
      %376 = vmatprep.subr.bf16.mxu0 0
      %377 = vmatpush2.bf16.msra.mxu0 0
      %378 = vmatprep.subr.bf16.mxu0 0
      %379 = vmatpush2.bf16.msra.mxu0 0
      %380 = vmatprep.subr.bf16.mxu0 0
      %381 = vmatpush2.bf16.msra.mxu0 0
      %382 = vmatprep.subr.bf16.mxu0 0
      %383 = vmatpush2.bf16.msra.mxu0 0
      %384 = vmatprep.subr.bf16.mxu0 0
      %385 = vmatpush2.bf16.msra.mxu0 0
      %386 = vmatprep.subr.bf16.mxu0 0
      %387 = vmatpush2.bf16.msra.mxu0 0
      %388 = vmatprep.subr.bf16.mxu0 0
      %389 = vmatpush2.bf16.msra.mxu0 0
      %390 = vmatprep.mubr.bf16.mxu0 0
      %391 = vmatmul.mubr.bf16.gmra.mxu0 %v352
      %v392 = vpop.f32.mrf.mxu0
      %v393 = vadd.f32 0.0, %v392
      %v394 = vpop.f32.mrf.mxu0
      %v395 = vpop.f32.mrf.mxu0
      %v396 = vpop.f32.mrf.mxu0
      %397 = vdwg.mxu0
      %v398 = vpack.c.bf16 %v393, %v393
      %399 = vst [vmem:[%s340] sm:$0x1] %v398
      %v400 = vld [vmem:[%s4] sm:$0x1]
      %v401 = vld [vmem:[%s334] sm:$0x3]
      %vm402 = vcmask 31744
      %v404 = vsel %vm402, %v400, 0
      %vm406 = vcmask 1041408
      %v408 = vsel %vm406, %v401, 0
      %410 = vmatprep.subr.bf16.mxu0 0
      %411 = vmatpush1.bf16.msra.mxu0 0
      %412 = vmatprep.subr.bf16.mxu0 0
      %413 = vmatpush1.bf16.msra.mxu0 0
      %414 = vmatprep.subr.bf16.mxu0 0
      %415 = vmatpush1.bf16.msra.mxu0 0
      %416 = vmatprep.subr.bf16.mxu0 0
      %417 = vmatpush1.bf16.msra.mxu0 0
      %418 = vmatprep.subr.bf16.mxu0 0
      %419 = vmatpush1.bf16.msra.mxu0 0
      %420 = vmatprep.subr.bf16.mxu0 0
      %421 = vmatpush1.bf16.msra.mxu0 0
      %422 = vmatprep.subr.bf16.mxu0 0
      %423 = vmatpush1.bf16.msra.mxu0 0
      %424 = vmatprep.subr.bf16.mxu0 0
      %425 = vmatpush1.bf16.msra.mxu0 %v408
      %426 = vmatprep.subr.bf16.mxu0 0
      %427 = vmatpush2.bf16.msra.mxu0 0
      %428 = vmatprep.subr.bf16.mxu0 0
      %429 = vmatpush2.bf16.msra.mxu0 0
      %430 = vmatprep.subr.bf16.mxu0 0
      %431 = vmatpush2.bf16.msra.mxu0 0
      %432 = vmatprep.subr.bf16.mxu0 0
      %433 = vmatpush2.bf16.msra.mxu0 0
      %434 = vmatprep.subr.bf16.mxu0 0
      %435 = vmatpush2.bf16.msra.mxu0 0
      %436 = vmatprep.subr.bf16.mxu0 0
      %437 = vmatpush2.bf16.msra.mxu0 0
      %438 = vmatprep.subr.bf16.mxu0 0
      %439 = vmatpush2.bf16.msra.mxu0 0
      %440 = vmatprep.subr.bf16.mxu0 0
      %441 = vmatpush2.bf16.msra.mxu0 0
      %442 = vmatprep.mubr.bf16.mxu0 0
      %443 = vmatmul.mubr.bf16.gmra.mxu0 %v404
      %v444 = vpop.f32.mrf.mxu0
      %v445 = vadd.f32 0.0, %v444
      %v446 = vpop.f32.mrf.mxu0
      %v447 = vpop.f32.mrf.mxu0
      %v448 = vpop.f32.mrf.mxu0
      %449 = vdwg.mxu0
      %v450 = vpack.c.bf16 %v445, %v445
      %451 = vst [vmem:[%s343] sm:$0x1] %v450
      %v452 = vld [vmem:[%s5] sm:$0x1]
      %v453 = vld [vmem:[%s337] sm:$0x1]
      %vm454 = vcmask 15360
      %v456 = vsel %vm454, %v452, 0
      %vm458 = vcmask 1040384
      %v460 = vsel %vm458, %v453, 0
      %462 = vmatprep.subr.bf16.mxu0 0
      %463 = vmatpush1.bf16.msra.mxu0 0
      %464 = vmatprep.subr.bf16.mxu0 0
      %465 = vmatpush1.bf16.msra.mxu0 0
      %466 = vmatprep.subr.bf16.mxu0 0
      %467 = vmatpush1.bf16.msra.mxu0 0
      %468 = vmatprep.subr.bf16.mxu0 0
      %469 = vmatpush1.bf16.msra.mxu0 0
      %470 = vmatprep.subr.bf16.mxu0 0
      %471 = vmatpush1.bf16.msra.mxu0 0
      %472 = vmatprep.subr.bf16.mxu0 0
      %473 = vmatpush1.bf16.msra.mxu0 0
      %474 = vmatprep.subr.bf16.mxu0 0
      %475 = vmatpush1.bf16.msra.mxu0 0
      %476 = vmatprep.subr.bf16.mxu0 0
      %477 = vmatpush1.bf16.msra.mxu0 %v460
      %478 = vmatprep.subr.bf16.mxu0 0
      %479 = vmatpush2.bf16.msra.mxu0 0
      %480 = vmatprep.subr.bf16.mxu0 0
      %481 = vmatpush2.bf16.msra.mxu0 0
      %482 = vmatprep.subr.bf16.mxu0 0
      %483 = vmatpush2.bf16.msra.mxu0 0
      %484 = vmatprep.subr.bf16.mxu0 0
      %485 = vmatpush2.bf16.msra.mxu0 0
      %486 = vmatprep.subr.bf16.mxu0 0
      %487 = vmatpush2.bf16.msra.mxu0 0
      %488 = vmatprep.subr.bf16.mxu0 0
      %489 = vmatpush2.bf16.msra.mxu0 0
      %490 = vmatprep.subr.bf16.mxu0 0
      %491 = vmatpush2.bf16.msra.mxu0 0
      %492 = vmatprep.subr.bf16.mxu0 0
      %493 = vmatpush2.bf16.msra.mxu0 0
      %494 = vmatprep.mubr.bf16.mxu0 0
      %495 = vmatmul.mubr.bf16.gmra.mxu0 %v456
      %v496 = vpop.f32.mrf.mxu0
      %v497 = vadd.f32 0.0, %v496
      %v498 = vpop.f32.mrf.mxu0
      %v499 = vpop.f32.mrf.mxu0
      %v500 = vpop.f32.mrf.mxu0
      %501 = vdwg.mxu0
      %v502 = vpack.c.bf16 %v497, %v497
      %503 = vst [vmem:[%s346] sm:$0x1] %v502
      %p504 = scmp.lt.s32.totalorder %s20, 1
      %s505 = scalar_select %p504, %s20, 1
      %s506 = scalar_lea.vmem %s6, %s505
      %p507 = scmp.lt.s32.totalorder %s20, 1
      %s508 = scalar_select %p507, %s20, 1
      %s509 = scalar_lea.vmem %s7, %s508
      %p510 = scmp.lt.s32.totalorder %s20, 1
      %s511 = scalar_select %p510, %s20, 1
      %s512 = scalar_lea.vmem %s8, %s511
      // Predicated region
      $region45: #{efficientvit_forward.9} parent=43 // pred_check
        %p513 = pneg %p179
      $region46: #{efficientvit_forward.9} parent=43 // pred_check_branch
        %515 = sbr.rel (%p513) target = $region48
      $region47: #{efficientvit_forward.9} parent=43 // pred_region
        _
      $region48: #{efficientvit_forward.9} parent=43 // pred_fallthru
        _
      // Predicated region
      $region49: #{efficientvit_forward.9} parent=43 // pred_check
        %p516 = pneg %p205
      $region50: #{efficientvit_forward.9} parent=43 // pred_check_branch
        %518 = sbr.rel (%p516) target = $region52
      $region51: #{efficientvit_forward.9} parent=43 // pred_region
        _
      $region52: #{efficientvit_forward.9} parent=43 // pred_fallthru
        _
      // Predicated region
      $region53: #{efficientvit_forward.9} parent=43 // pred_check
        %p519 = pneg %p231
      $region54: #{efficientvit_forward.9} parent=43 // pred_check_branch
        %521 = sbr.rel (%p519) target = $region56
      $region55: #{efficientvit_forward.9} parent=43 // pred_region
        _
      $region56: #{efficientvit_forward.9} parent=43 // pred_fallthru
        _
    $region44: #{efficientvit_forward.9} parent=5 // pred_fallthru
      _
    %p522 = scmp.le.s32.totalorder 2, %s15
    // Predicated region
    $region57: #{efficientvit_forward.9} parent=5 // pred_check
      %p523 = pneg %p522
    $region58: #{efficientvit_forward.9} parent=5 // pred_check_branch
      %525 = sbr.rel (%p523) target = $region60
    $region59: #{efficientvit_forward.9} parent=5 // pred_region
      %s526 = ssub.s32 %s15, 2
      // Predicated region
      $region61: #{efficientvit_forward.9} parent=59 // pred_check
        %p527 = pneg %p185
      $region62: #{efficientvit_forward.9} parent=59 // pred_check_branch
        %529 = sbr.rel (%p527) target = $region64
      $region63: #{efficientvit_forward.9} parent=59 // pred_region
        %p530 = scmp.lt.s32.totalorder %s21, 1
        %s531 = scalar_select %p530, %s21, 1
        %s532 = scalar_lea.vmem %s6, %s531
      $region64: #{efficientvit_forward.9} parent=59 // pred_fallthru
        _
      // Predicated region
      $region65: #{efficientvit_forward.9} parent=59 // pred_check
        %p533 = pneg %p211
      $region66: #{efficientvit_forward.9} parent=59 // pred_check_branch
        %535 = sbr.rel (%p533) target = $region68
      $region67: #{efficientvit_forward.9} parent=59 // pred_region
        %p536 = scmp.lt.s32.totalorder %s21, 1
        %s537 = scalar_select %p536, %s21, 1
        %s538 = scalar_lea.vmem %s7, %s537
      $region68: #{efficientvit_forward.9} parent=59 // pred_fallthru
        _
      // Predicated region
      $region69: #{efficientvit_forward.9} parent=59 // pred_check
        %p539 = pneg %p237
      $region70: #{efficientvit_forward.9} parent=59 // pred_check_branch
        %541 = sbr.rel (%p539) target = $region72
      $region71: #{efficientvit_forward.9} parent=59 // pred_region
        %p542 = scmp.lt.s32.totalorder %s21, 1
        %s543 = scalar_select %p542, %s21, 1
        %s544 = scalar_lea.vmem %s8, %s543
      $region72: #{efficientvit_forward.9} parent=59 // pred_fallthru
        _
    $region60: #{efficientvit_forward.9} parent=5 // pred_fallthru
      _
  $region6: #{efficientvit_forward.9} parent=0 // loop_footer
    %s19 = sadd.s32 1, %s15
  $region7: #{efficientvit_forward.9} parent=0 // loop_footer_branch
    %14 = sbr.rel target = $region3
  $region8: #{efficientvit_forward.9} parent=0 // loop_exit
    _

// kernel: efficientvit_forward.10
$region0: #{efficientvit_forward.10}
  #allocation0 [shape = 'u32[]', space=smem, size = 0x4, offset = 0x4, fixed_abs, tag = 'smem constant byte address 0x4 - core index']
  #allocation1 [shape = 'u32[144,128]{1,0:T(1,128)}', space=vmem, size = 0x12000, scoped, tag = 'internal scratch']
  %s0 = inlined_call_operand.vmem [shape: bf16[2,8,32], index: 0, kind: input, shape index: {}]
  %s1 = inlined_call_operand.vmem [shape: bf16[2,4,64], index: 1, kind: input, shape index: {}]
  %s2 = inlined_call_operand.vmem [shape: bf16[2,2,128], index: 2, kind: input, shape index: {}]
  %s3 = inlined_call_operand.vmem [shape: bf16[2,8], index: 3, kind: input, shape index: {}]
  %s4 = inlined_call_operand.vmem [shape: bf16[2,4], index: 4, kind: input, shape index: {}]
  %s5 = inlined_call_operand.vmem [shape: bf16[2,2], index: 5, kind: input, shape index: {}]
  %s6 = inlined_call_operand.vmem [shape: bf16[2,2,32], index: 6, kind: output, shape index: {0}]
  %s7 = inlined_call_operand.vmem [shape: bf16[2,2,64], index: 7, kind: output, shape index: {1}]
  %s8 = inlined_call_operand.vmem [shape: bf16[2,2,128], index: 8, kind: output, shape index: {2}]
  %9 = xla_tuple %s6, %s7, %s8
  %s10 = sld [smem:[#allocation0]]
  $region73: #{efficientvit_forward.10} parent=0
    _
  %s12 = ssub.s32 1, %s10
  %s13 = scalar_select 0, %s12, %s10
  loop: start=0, step=1, limit=4
  $region2: #{efficientvit_forward.10} parent=0 // loop_pre_header
    _
  $region3: #{efficientvit_forward.10} parent=0 // loop_header
    %s15 = sphi 0, %s19
    %p16 = scmp.ge.s32.totalorder %s15, 4
    %s25 = sphi 0, %s27
    %s28 = sphi 0, %s25
    %s29 = sphi 0, %s28
    %s45 = sphi 0, %s29
    %s51 = sphi 0, %s53
    %s54 = sphi 0, %s51
    %s55 = sphi 0, %s54
    %s71 = sphi 0, %s55
    %s77 = sphi 0, %s79
    %s80 = sphi 0, %s77
    %s81 = sphi 0, %s80
    %s97 = sphi 0, %s81
    %s101 = sphi 0, %s101
    %s103 = sphi 0, %s101
    %s104 = sphi 0, %s103
    %s118 = sphi 0, %s104
    %s122 = sphi 0, %s122
    %s124 = sphi 0, %s122
    %s125 = sphi 0, %s124
    %s139 = sphi 0, %s125
    %s143 = sphi 0, %s143
    %s145 = sphi 0, %s143
    %s146 = sphi 0, %s145
    %s160 = sphi 0, %s146
    %s166 = sphi 0, %s168
    %s169 = sphi 0, %s166
    %s170 = sphi 0, %s169
    %s186 = sphi 0, %s170
    %s192 = sphi 0, %s194
    %s195 = sphi 0, %s192
    %s196 = sphi 0, %s195
    %s212 = sphi 0, %s196
    %s218 = sphi 0, %s220
    %s221 = sphi 0, %s218
    %s222 = sphi 0, %s221
    %s238 = sphi 0, %s222
  $region4: #{efficientvit_forward.10} parent=0 // loop_header_branch
    %18 = sbr.rel (%p16) target = $region8
  $region5: #{efficientvit_forward.10} parent=0 // loop_body
    %s20 = ssub.s32 %s15, 1
    %s21 = ssub.s32 %s15, 2
    %s22 = sadd.s32 %s15, 1
    %s23 = ssub.s32 %s15, %s22
    %p24 = scmp.eq.s32.totalorder %s23, 0
    %s26 = sadd.s32 %s25, 1
    %s27 = scalar_select %p24, %s25, %s26
    %p30 = pneg %p24
    %p31 = scmp.eq.s32.totalorder %s15, 1
    %p32 = por %p30, %p31
    %p33 = scmp.ne.s32.totalorder %s25, %s28
    %p34 = scmp.eq.s32.totalorder %s15, 0
    %p35 = por %p33, %p34
    %p36 = scmp.ne.s32.totalorder %s25, %s28
    %p37 = scmp.eq.s32.totalorder %s20, 1
    %p38 = por %p36, %p37
    %p39 = scmp.ne.s32.totalorder %s28, %s29
    %p40 = scmp.eq.s32.totalorder %s20, 0
    %p41 = por %p39, %p40
    %p42 = scmp.ne.s32.totalorder %s28, %s29
    %p43 = scmp.eq.s32.totalorder %s21, 1
    %p44 = por %p42, %p43
    %p46 = scmp.ne.s32.totalorder %s29, %s45
    %p47 = scmp.eq.s32.totalorder %s21, 0
    %p48 = por %p46, %p47
    %s49 = ssub.s32 %s15, %s22
    %p50 = scmp.eq.s32.totalorder %s49, 0
    %s52 = sadd.s32 %s51, 1
    %s53 = scalar_select %p50, %s51, %s52
    %p56 = pneg %p50
    %p57 = scmp.eq.s32.totalorder %s15, 1
    %p58 = por %p56, %p57
    %p59 = scmp.ne.s32.totalorder %s51, %s54
    %p60 = scmp.eq.s32.totalorder %s15, 0
    %p61 = por %p59, %p60
    %p62 = scmp.ne.s32.totalorder %s51, %s54
    %p63 = scmp.eq.s32.totalorder %s20, 1
    %p64 = por %p62, %p63
    %p65 = scmp.ne.s32.totalorder %s54, %s55
    %p66 = scmp.eq.s32.totalorder %s20, 0
    %p67 = por %p65, %p66
    %p68 = scmp.ne.s32.totalorder %s54, %s55
    %p69 = scmp.eq.s32.totalorder %s21, 1
    %p70 = por %p68, %p69
    %p72 = scmp.ne.s32.totalorder %s55, %s71
    %p73 = scmp.eq.s32.totalorder %s21, 0
    %p74 = por %p72, %p73
    %s75 = ssub.s32 %s15, %s22
    %p76 = scmp.eq.s32.totalorder %s75, 0
    %s78 = sadd.s32 %s77, 1
    %s79 = scalar_select %p76, %s77, %s78
    %p82 = pneg %p76
    %p83 = scmp.eq.s32.totalorder %s15, 1
    %p84 = por %p82, %p83
    %p85 = scmp.ne.s32.totalorder %s77, %s80
    %p86 = scmp.eq.s32.totalorder %s15, 0
    %p87 = por %p85, %p86
    %p88 = scmp.ne.s32.totalorder %s77, %s80
    %p89 = scmp.eq.s32.totalorder %s20, 1
    %p90 = por %p88, %p89
    %p91 = scmp.ne.s32.totalorder %s80, %s81
    %p92 = scmp.eq.s32.totalorder %s20, 0
    %p93 = por %p91, %p92
    %p94 = scmp.ne.s32.totalorder %s80, %s81
    %p95 = scmp.eq.s32.totalorder %s21, 1
    %p96 = por %p94, %p95
    %p98 = scmp.ne.s32.totalorder %s81, %s97
    %p99 = scmp.eq.s32.totalorder %s21, 0
    %p100 = por %p98, %p99
    %s102 = sadd.s32 %s101, 1
    %p105 = scmp.eq.s32.totalorder %s15, 1
    %p106 = scmp.ne.s32.totalorder %s101, %s103
    %p107 = scmp.eq.s32.totalorder %s15, 0
    %p108 = por %p106, %p107
    %p109 = scmp.ne.s32.totalorder %s101, %s103
    %p110 = scmp.eq.s32.totalorder %s20, 1
    %p111 = por %p109, %p110
    %p112 = scmp.ne.s32.totalorder %s103, %s104
    %p113 = scmp.eq.s32.totalorder %s20, 0
    %p114 = por %p112, %p113
    %p115 = scmp.ne.s32.totalorder %s103, %s104
    %p116 = scmp.eq.s32.totalorder %s21, 1
    %p117 = por %p115, %p116
    %p119 = scmp.ne.s32.totalorder %s104, %s118
    %p120 = scmp.eq.s32.totalorder %s21, 0
    %p121 = por %p119, %p120
    %s123 = sadd.s32 %s122, 1
    %p126 = scmp.eq.s32.totalorder %s15, 1
    %p127 = scmp.ne.s32.totalorder %s122, %s124
    %p128 = scmp.eq.s32.totalorder %s15, 0
    %p129 = por %p127, %p128
    %p130 = scmp.ne.s32.totalorder %s122, %s124
    %p131 = scmp.eq.s32.totalorder %s20, 1
    %p132 = por %p130, %p131
    %p133 = scmp.ne.s32.totalorder %s124, %s125
    %p134 = scmp.eq.s32.totalorder %s20, 0
    %p135 = por %p133, %p134
    %p136 = scmp.ne.s32.totalorder %s124, %s125
    %p137 = scmp.eq.s32.totalorder %s21, 1
    %p138 = por %p136, %p137
    %p140 = scmp.ne.s32.totalorder %s125, %s139
    %p141 = scmp.eq.s32.totalorder %s21, 0
    %p142 = por %p140, %p141
    %s144 = sadd.s32 %s143, 1
    %p147 = scmp.eq.s32.totalorder %s15, 1
    %p148 = scmp.ne.s32.totalorder %s143, %s145
    %p149 = scmp.eq.s32.totalorder %s15, 0
    %p150 = por %p148, %p149
    %p151 = scmp.ne.s32.totalorder %s143, %s145
    %p152 = scmp.eq.s32.totalorder %s20, 1
    %p153 = por %p151, %p152
    %p154 = scmp.ne.s32.totalorder %s145, %s146
    %p155 = scmp.eq.s32.totalorder %s20, 0
    %p156 = por %p154, %p155
    %p157 = scmp.ne.s32.totalorder %s145, %s146
    %p158 = scmp.eq.s32.totalorder %s21, 1
    %p159 = por %p157, %p158
    %p161 = scmp.ne.s32.totalorder %s146, %s160
    %p162 = scmp.eq.s32.totalorder %s21, 0
    %p163 = por %p161, %p162
    %s164 = ssub.s32 %s15, %s22
    %p165 = scmp.eq.s32.totalorder %s164, 0
    %s167 = sadd.s32 %s166, 1
    %s168 = scalar_select %p165, %s166, %s167
    %p171 = pneg %p165
    %p172 = scmp.eq.s32.totalorder %s15, 1
    %p173 = por %p171, %p172
    %p174 = scmp.ne.s32.totalorder %s166, %s169
    %p175 = scmp.eq.s32.totalorder %s15, 0
    %p176 = por %p174, %p175
    %p177 = scmp.ne.s32.totalorder %s166, %s169
    %p178 = scmp.eq.s32.totalorder %s20, 1
    %p179 = por %p177, %p178
    %p180 = scmp.ne.s32.totalorder %s169, %s170
    %p181 = scmp.eq.s32.totalorder %s20, 0
    %p182 = por %p180, %p181
    %p183 = scmp.ne.s32.totalorder %s169, %s170
    %p184 = scmp.eq.s32.totalorder %s21, 1
    %p185 = por %p183, %p184
    %p187 = scmp.ne.s32.totalorder %s170, %s186
    %p188 = scmp.eq.s32.totalorder %s21, 0
    %p189 = por %p187, %p188
    %s190 = ssub.s32 %s15, %s22
    %p191 = scmp.eq.s32.totalorder %s190, 0
    %s193 = sadd.s32 %s192, 1
    %s194 = scalar_select %p191, %s192, %s193
    %p197 = pneg %p191
    %p198 = scmp.eq.s32.totalorder %s15, 1
    %p199 = por %p197, %p198
    %p200 = scmp.ne.s32.totalorder %s192, %s195
    %p201 = scmp.eq.s32.totalorder %s15, 0
    %p202 = por %p200, %p201
    %p203 = scmp.ne.s32.totalorder %s192, %s195
    %p204 = scmp.eq.s32.totalorder %s20, 1
    %p205 = por %p203, %p204
    %p206 = scmp.ne.s32.totalorder %s195, %s196
    %p207 = scmp.eq.s32.totalorder %s20, 0
    %p208 = por %p206, %p207
    %p209 = scmp.ne.s32.totalorder %s195, %s196
    %p210 = scmp.eq.s32.totalorder %s21, 1
    %p211 = por %p209, %p210
    %p213 = scmp.ne.s32.totalorder %s196, %s212
    %p214 = scmp.eq.s32.totalorder %s21, 0
    %p215 = por %p213, %p214
    %s216 = ssub.s32 %s15, %s22
    %p217 = scmp.eq.s32.totalorder %s216, 0
    %s219 = sadd.s32 %s218, 1
    %s220 = scalar_select %p217, %s218, %s219
    %p223 = pneg %p217
    %p224 = scmp.eq.s32.totalorder %s15, 1
    %p225 = por %p223, %p224
    %p226 = scmp.ne.s32.totalorder %s218, %s221
    %p227 = scmp.eq.s32.totalorder %s15, 0
    %p228 = por %p226, %p227
    %p229 = scmp.ne.s32.totalorder %s218, %s221
    %p230 = scmp.eq.s32.totalorder %s20, 1
    %p231 = por %p229, %p230
    %p232 = scmp.ne.s32.totalorder %s221, %s222
    %p233 = scmp.eq.s32.totalorder %s20, 0
    %p234 = por %p232, %p233
    %p235 = scmp.ne.s32.totalorder %s221, %s222
    %p236 = scmp.eq.s32.totalorder %s21, 1
    %p237 = por %p235, %p236
    %p239 = scmp.ne.s32.totalorder %s222, %s238
    %p240 = scmp.eq.s32.totalorder %s21, 0
    %p241 = por %p239, %p240
    %p242 = scmp.le.s32.totalorder 1, %s15
    %p243 = scmp.lt.s32.totalorder %s15, 3
    %p244 = pnand %p242, %p243
    %p245 = pneg %p244
    // Predicated region
    $region9: #{efficientvit_forward.10} parent=5 // pred_check
      _
    $region10: #{efficientvit_forward.10} parent=5 // pred_check_branch
      %247 = sbr.rel (%p244) target = $region12
    $region11: #{efficientvit_forward.10} parent=5 // pred_region
      %s248 = ssub.s32 %s15, 1
      // Predicated region
      $region13: #{efficientvit_forward.10} parent=11 // pred_check
        %p249 = pneg %p114
      $region14: #{efficientvit_forward.10} parent=11 // pred_check_branch
        %251 = sbr.rel (%p249) target = $region16
      $region15: #{efficientvit_forward.10} parent=11 // pred_region
        _
      $region16: #{efficientvit_forward.10} parent=11 // pred_fallthru
        _
      // Predicated region
      $region17: #{efficientvit_forward.10} parent=11 // pred_check
        %p252 = pneg %p135
      $region18: #{efficientvit_forward.10} parent=11 // pred_check_branch
        %254 = sbr.rel (%p252) target = $region20
      $region19: #{efficientvit_forward.10} parent=11 // pred_region
        _
      $region20: #{efficientvit_forward.10} parent=11 // pred_fallthru
        _
      // Predicated region
      $region21: #{efficientvit_forward.10} parent=11 // pred_check
        %p255 = pneg %p156
      $region22: #{efficientvit_forward.10} parent=11 // pred_check_branch
        %257 = sbr.rel (%p255) target = $region24
      $region23: #{efficientvit_forward.10} parent=11 // pred_region
        _
      $region24: #{efficientvit_forward.10} parent=11 // pred_fallthru
        _
    $region12: #{efficientvit_forward.10} parent=5 // pred_fallthru
      _
    %p258 = scmp.lt.s32.totalorder %s15, 2
    // Predicated region
    $region25: #{efficientvit_forward.10} parent=5 // pred_check
      %p259 = pneg %p258
    $region26: #{efficientvit_forward.10} parent=5 // pred_check_branch
      %261 = sbr.rel (%p259) target = $region28
    $region27: #{efficientvit_forward.10} parent=5 // pred_region
      // Predicated region
      $region29: #{efficientvit_forward.10} parent=27 // pred_check
        %p262 = pneg %p35
      $region30: #{efficientvit_forward.10} parent=27 // pred_check_branch
        %264 = sbr.rel (%p262) target = $region32
      $region31: #{efficientvit_forward.10} parent=27 // pred_region
        %p265 = scmp.lt.s32.totalorder %s15, 1
        %s266 = scalar_select %p265, %s15, 1
        %s267 = smul.addr %s266, 4
        %s268 = scalar_lea.vmem %s0, %s267
      $region32: #{efficientvit_forward.10} parent=27 // pred_fallthru
        _
      // Predicated region
      $region33: #{efficientvit_forward.10} parent=27 // pred_check
        %p269 = pneg %p61
      $region34: #{efficientvit_forward.10} parent=27 // pred_check_branch
        %271 = sbr.rel (%p269) target = $region36
      $region35: #{efficientvit_forward.10} parent=27 // pred_region
        %p272 = scmp.lt.s32.totalorder %s15, 1
        %s273 = scalar_select %p272, %s15, 1
        %s274 = smul.addr %s273, 2
        %s275 = scalar_lea.vmem %s1, %s274
      $region36: #{efficientvit_forward.10} parent=27 // pred_fallthru
        _
      // Predicated region
      $region37: #{efficientvit_forward.10} parent=27 // pred_check
        %p276 = pneg %p87
      $region38: #{efficientvit_forward.10} parent=27 // pred_check_branch
        %278 = sbr.rel (%p276) target = $region40
      $region39: #{efficientvit_forward.10} parent=27 // pred_region
        %p279 = scmp.lt.s32.totalorder %s15, 1
        %s280 = scalar_select %p279, %s15, 1
        %s281 = scalar_lea.vmem %s2, %s280
      $region40: #{efficientvit_forward.10} parent=27 // pred_fallthru
        _
    $region28: #{efficientvit_forward.10} parent=5 // pred_fallthru
      _
    %p282 = scmp.le.s32.totalorder 1, %s15
    %p283 = scmp.lt.s32.totalorder %s15, 3
    %p284 = pnand %p282, %p283
    %p285 = pneg %p284
    // Predicated region
    $region41: #{efficientvit_forward.10} parent=5 // pred_check
      _
    $region42: #{efficientvit_forward.10} parent=5 // pred_check_branch
      %287 = sbr.rel (%p284) target = $region44
    $region43: #{efficientvit_forward.10} parent=5 // pred_region
      %s288 = ssub.s32 %s15, 1
      %p289 = scmp.lt.s32.totalorder %s20, 1
      %s290 = scalar_select %p289, %s20, 1
      %s291 = smul.addr %s290, 4
      %s292 = scalar_lea.vmem %s0, %s291
      %p293 = pneg %p41
      %p294 = pneg %p38
      %p295 = scmp.lt.s32.totalorder %s20, 1
      %s296 = scalar_select %p295, %s20, 1
      %s297 = smul.addr %s296, 2
      %s298 = scalar_lea.vmem %s1, %s297
      %p299 = pneg %p67
      %p300 = pneg %p64
      %p301 = scmp.lt.s32.totalorder %s20, 1
      %s302 = scalar_select %p301, %s20, 1
      %s303 = scalar_lea.vmem %s2, %s302
      %p304 = pneg %p93
      %p305 = pneg %p90
      %p306 = pneg %p114
      %p307 = pneg %p111
      %p308 = pneg %p135
      %p309 = pneg %p132
      %p310 = pneg %p156
      %p311 = pneg %p153
      %p312 = pneg %p182
      %p313 = pneg %p179
      %p314 = scmp.lt.s32.totalorder %s20, 1
      %s315 = scalar_select %p314, %s20, 1
      %s316 = scalar_lea.vmem %s6, %s315
      %p317 = pneg %p208
      %p318 = pneg %p205
      %p319 = scmp.lt.s32.totalorder %s20, 1
      %s320 = scalar_select %p319, %s20, 1
      %s321 = scalar_lea.vmem %s7, %s320
      %p322 = pneg %p234
      %p323 = pneg %p231
      %p324 = scmp.lt.s32.totalorder %s20, 1
      %s325 = scalar_select %p324, %s20, 1
      %s326 = scalar_lea.vmem %s8, %s325
      %p327 = scmp.lt.s32.totalorder %s20, 1
      %s328 = scalar_select %p327, %s20, 1
      %s329 = smul.addr %s328, 4
      %s330 = scalar_lea.vmem %s0, %s329
      %p331 = scmp.lt.s32.totalorder %s20, 1
      %s332 = scalar_select %p331, %s20, 1
      %s333 = smul.addr %s332, 2
      %s334 = scalar_lea.vmem %s1, %s333
      %p335 = scmp.lt.s32.totalorder %s20, 1
      %s336 = scalar_select %p335, %s20, 1
      %s337 = scalar_lea.vmem %s2, %s336
      %p338 = scmp.lt.s32.totalorder %s20, 1
      %s339 = scalar_select %p338, %s20, 1
      %s340 = scalar_lea.vmem %s6, %s339
      %p341 = scmp.lt.s32.totalorder %s20, 1
      %s342 = scalar_select %p341, %s20, 1
      %s343 = scalar_lea.vmem %s7, %s342
      %p344 = scmp.lt.s32.totalorder %s20, 1
      %s345 = scalar_select %p344, %s20, 1
      %s346 = scalar_lea.vmem %s8, %s345
      %v348 = vld [vmem:[%s3] sm:$0x1]
      %v349 = vld [vmem:[%s330] sm:$0xf]
      %vm350 = vcmask 64512
      %v352 = vsel %vm350, %v348, 0
      %vm354 = vcmask 1043456
      %v356 = vsel %vm354, %v349, 0
      %358 = vmatprep.subr.bf16.mxu0 0
      %359 = vmatpush1.bf16.msra.mxu0 0
      %360 = vmatprep.subr.bf16.mxu0 0
      %361 = vmatpush1.bf16.msra.mxu0 0
      %362 = vmatprep.subr.bf16.mxu0 0
      %363 = vmatpush1.bf16.msra.mxu0 0
      %364 = vmatprep.subr.bf16.mxu0 0
      %365 = vmatpush1.bf16.msra.mxu0 0
      %366 = vmatprep.subr.bf16.mxu0 0
      %367 = vmatpush1.bf16.msra.mxu0 0
      %368 = vmatprep.subr.bf16.mxu0 0
      %369 = vmatpush1.bf16.msra.mxu0 0
      %370 = vmatprep.subr.bf16.mxu0 0
      %371 = vmatpush1.bf16.msra.mxu0 0
      %372 = vmatprep.subr.bf16.mxu0 0
      %373 = vmatpush1.bf16.msra.mxu0 %v356
      %374 = vmatprep.subr.bf16.mxu0 0
      %375 = vmatpush2.bf16.msra.mxu0 0
      %376 = vmatprep.subr.bf16.mxu0 0
      %377 = vmatpush2.bf16.msra.mxu0 0
      %378 = vmatprep.subr.bf16.mxu0 0
      %379 = vmatpush2.bf16.msra.mxu0 0
      %380 = vmatprep.subr.bf16.mxu0 0
      %381 = vmatpush2.bf16.msra.mxu0 0
      %382 = vmatprep.subr.bf16.mxu0 0
      %383 = vmatpush2.bf16.msra.mxu0 0
      %384 = vmatprep.subr.bf16.mxu0 0
      %385 = vmatpush2.bf16.msra.mxu0 0
      %386 = vmatprep.subr.bf16.mxu0 0
      %387 = vmatpush2.bf16.msra.mxu0 0
      %388 = vmatprep.subr.bf16.mxu0 0
      %389 = vmatpush2.bf16.msra.mxu0 0
      %390 = vmatprep.mubr.bf16.mxu0 0
      %391 = vmatmul.mubr.bf16.gmra.mxu0 %v352
      %v392 = vpop.f32.mrf.mxu0
      %v393 = vadd.f32 0.0, %v392
      %v394 = vpop.f32.mrf.mxu0
      %v395 = vpop.f32.mrf.mxu0
      %v396 = vpop.f32.mrf.mxu0
      %397 = vdwg.mxu0
      %v398 = vpack.c.bf16 %v393, %v393
      %vm399 = vcmask 253952
      %400 = vst.msk [vmem:[%s340] sm:$0x1] %vm399, %v398
      %v401 = vld [vmem:[%s4] sm:$0x1]
      %v402 = vld [vmem:[%s334] sm:$0x3]
      %vm403 = vcmask 31744
      %v405 = vsel %vm403, %v401, 0
      %vm407 = vcmask 1041408
      %v409 = vsel %vm407, %v402, 0
      %411 = vmatprep.subr.bf16.mxu0 0
      %412 = vmatpush1.bf16.msra.mxu0 0
      %413 = vmatprep.subr.bf16.mxu0 0
      %414 = vmatpush1.bf16.msra.mxu0 0
      %415 = vmatprep.subr.bf16.mxu0 0
      %416 = vmatpush1.bf16.msra.mxu0 0
      %417 = vmatprep.subr.bf16.mxu0 0
      %418 = vmatpush1.bf16.msra.mxu0 0
      %419 = vmatprep.subr.bf16.mxu0 0
      %420 = vmatpush1.bf16.msra.mxu0 0
      %421 = vmatprep.subr.bf16.mxu0 0
      %422 = vmatpush1.bf16.msra.mxu0 0
      %423 = vmatprep.subr.bf16.mxu0 0
      %424 = vmatpush1.bf16.msra.mxu0 0
      %425 = vmatprep.subr.bf16.mxu0 0
      %426 = vmatpush1.bf16.msra.mxu0 %v409
      %427 = vmatprep.subr.bf16.mxu0 0
      %428 = vmatpush2.bf16.msra.mxu0 0
      %429 = vmatprep.subr.bf16.mxu0 0
      %430 = vmatpush2.bf16.msra.mxu0 0
      %431 = vmatprep.subr.bf16.mxu0 0
      %432 = vmatpush2.bf16.msra.mxu0 0
      %433 = vmatprep.subr.bf16.mxu0 0
      %434 = vmatpush2.bf16.msra.mxu0 0
      %435 = vmatprep.subr.bf16.mxu0 0
      %436 = vmatpush2.bf16.msra.mxu0 0
      %437 = vmatprep.subr.bf16.mxu0 0
      %438 = vmatpush2.bf16.msra.mxu0 0
      %439 = vmatprep.subr.bf16.mxu0 0
      %440 = vmatpush2.bf16.msra.mxu0 0
      %441 = vmatprep.subr.bf16.mxu0 0
      %442 = vmatpush2.bf16.msra.mxu0 0
      %443 = vmatprep.mubr.bf16.mxu0 0
      %444 = vmatmul.mubr.bf16.gmra.mxu0 %v405
      %v445 = vpop.f32.mrf.mxu0
      %v446 = vadd.f32 0.0, %v445
      %v447 = vpop.f32.mrf.mxu0
      %v448 = vpop.f32.mrf.mxu0
      %v449 = vpop.f32.mrf.mxu0
      %450 = vdwg.mxu0
      %v451 = vpack.c.bf16 %v446, %v446
      %vm452 = vcmask 516096
      %453 = vst.msk [vmem:[%s343] sm:$0x1] %vm452, %v451
      %v454 = vld [vmem:[%s5] sm:$0x1]
      %v455 = vld [vmem:[%s337] sm:$0x1]
      %vm456 = vcmask 15360
      %v458 = vsel %vm456, %v454, 0
      %vm460 = vcmask 1040384
      %v462 = vsel %vm460, %v455, 0
      %464 = vmatprep.subr.bf16.mxu0 0
      %465 = vmatpush1.bf16.msra.mxu0 0
      %466 = vmatprep.subr.bf16.mxu0 0
      %467 = vmatpush1.bf16.msra.mxu0 0
      %468 = vmatprep.subr.bf16.mxu0 0
      %469 = vmatpush1.bf16.msra.mxu0 0
      %470 = vmatprep.subr.bf16.mxu0 0
      %471 = vmatpush1.bf16.msra.mxu0 0
      %472 = vmatprep.subr.bf16.mxu0 0
      %473 = vmatpush1.bf16.msra.mxu0 0
      %474 = vmatprep.subr.bf16.mxu0 0
      %475 = vmatpush1.bf16.msra.mxu0 0
      %476 = vmatprep.subr.bf16.mxu0 0
      %477 = vmatpush1.bf16.msra.mxu0 0
      %478 = vmatprep.subr.bf16.mxu0 0
      %479 = vmatpush1.bf16.msra.mxu0 %v462
      %480 = vmatprep.subr.bf16.mxu0 0
      %481 = vmatpush2.bf16.msra.mxu0 0
      %482 = vmatprep.subr.bf16.mxu0 0
      %483 = vmatpush2.bf16.msra.mxu0 0
      %484 = vmatprep.subr.bf16.mxu0 0
      %485 = vmatpush2.bf16.msra.mxu0 0
      %486 = vmatprep.subr.bf16.mxu0 0
      %487 = vmatpush2.bf16.msra.mxu0 0
      %488 = vmatprep.subr.bf16.mxu0 0
      %489 = vmatpush2.bf16.msra.mxu0 0
      %490 = vmatprep.subr.bf16.mxu0 0
      %491 = vmatpush2.bf16.msra.mxu0 0
      %492 = vmatprep.subr.bf16.mxu0 0
      %493 = vmatpush2.bf16.msra.mxu0 0
      %494 = vmatprep.subr.bf16.mxu0 0
      %495 = vmatpush2.bf16.msra.mxu0 0
      %496 = vmatprep.mubr.bf16.mxu0 0
      %497 = vmatmul.mubr.bf16.gmra.mxu0 %v458
      %v498 = vpop.f32.mrf.mxu0
      %v499 = vadd.f32 0.0, %v498
      %v500 = vpop.f32.mrf.mxu0
      %v501 = vpop.f32.mrf.mxu0
      %v502 = vpop.f32.mrf.mxu0
      %503 = vdwg.mxu0
      %v504 = vpack.c.bf16 %v499, %v499
      %505 = vst [vmem:[%s346] sm:$0x1] %v504
      %p506 = scmp.lt.s32.totalorder %s20, 1
      %s507 = scalar_select %p506, %s20, 1
      %s508 = scalar_lea.vmem %s6, %s507
      %p509 = scmp.lt.s32.totalorder %s20, 1
      %s510 = scalar_select %p509, %s20, 1
      %s511 = scalar_lea.vmem %s7, %s510
      %p512 = scmp.lt.s32.totalorder %s20, 1
      %s513 = scalar_select %p512, %s20, 1
      %s514 = scalar_lea.vmem %s8, %s513
      // Predicated region
      $region45: #{efficientvit_forward.10} parent=43 // pred_check
        %p515 = pneg %p179
      $region46: #{efficientvit_forward.10} parent=43 // pred_check_branch
        %517 = sbr.rel (%p515) target = $region48
      $region47: #{efficientvit_forward.10} parent=43 // pred_region
        _
      $region48: #{efficientvit_forward.10} parent=43 // pred_fallthru
        _
      // Predicated region
      $region49: #{efficientvit_forward.10} parent=43 // pred_check
        %p518 = pneg %p205
      $region50: #{efficientvit_forward.10} parent=43 // pred_check_branch
        %520 = sbr.rel (%p518) target = $region52
      $region51: #{efficientvit_forward.10} parent=43 // pred_region
        _
      $region52: #{efficientvit_forward.10} parent=43 // pred_fallthru
        _
      // Predicated region
      $region53: #{efficientvit_forward.10} parent=43 // pred_check
        %p521 = pneg %p231
      $region54: #{efficientvit_forward.10} parent=43 // pred_check_branch
        %523 = sbr.rel (%p521) target = $region56
      $region55: #{efficientvit_forward.10} parent=43 // pred_region
        _
      $region56: #{efficientvit_forward.10} parent=43 // pred_fallthru
        _
    $region44: #{efficientvit_forward.10} parent=5 // pred_fallthru
      _
    %p524 = scmp.le.s32.totalorder 2, %s15
    // Predicated region
    $region57: #{efficientvit_forward.10} parent=5 // pred_check
      %p525 = pneg %p524
    $region58: #{efficientvit_forward.10} parent=5 // pred_check_branch
      %527 = sbr.rel (%p525) target = $region60
    $region59: #{efficientvit_forward.10} parent=5 // pred_region
      %s528 = ssub.s32 %s15, 2
      // Predicated region
      $region61: #{efficientvit_forward.10} parent=59 // pred_check
        %p529 = pneg %p185
      $region62: #{efficientvit_forward.10} parent=59 // pred_check_branch
        %531 = sbr.rel (%p529) target = $region64
      $region63: #{efficientvit_forward.10} parent=59 // pred_region
        %p532 = scmp.lt.s32.totalorder %s21, 1
        %s533 = scalar_select %p532, %s21, 1
        %s534 = scalar_lea.vmem %s6, %s533
      $region64: #{efficientvit_forward.10} parent=59 // pred_fallthru
        _
      // Predicated region
      $region65: #{efficientvit_forward.10} parent=59 // pred_check
        %p535 = pneg %p211
      $region66: #{efficientvit_forward.10} parent=59 // pred_check_branch
        %537 = sbr.rel (%p535) target = $region68
      $region67: #{efficientvit_forward.10} parent=59 // pred_region
        %p538 = scmp.lt.s32.totalorder %s21, 1
        %s539 = scalar_select %p538, %s21, 1
        %s540 = scalar_lea.vmem %s7, %s539
      $region68: #{efficientvit_forward.10} parent=59 // pred_fallthru
        _
      // Predicated region
      $region69: #{efficientvit_forward.10} parent=59 // pred_check
        %p541 = pneg %p237
      $region70: #{efficientvit_forward.10} parent=59 // pred_check_branch
        %543 = sbr.rel (%p541) target = $region72
      $region71: #{efficientvit_forward.10} parent=59 // pred_region
        %p544 = scmp.lt.s32.totalorder %s21, 1
        %s545 = scalar_select %p544, %s21, 1
        %s546 = scalar_lea.vmem %s8, %s545
      $region72: #{efficientvit_forward.10} parent=59 // pred_fallthru
        _
    $region60: #{efficientvit_forward.10} parent=5 // pred_fallthru
      _
  $region6: #{efficientvit_forward.10} parent=0 // loop_footer
    %s19 = sadd.s32 1, %s15
  $region7: #{efficientvit_forward.10} parent=0 // loop_footer_branch
    %14 = sbr.rel target = $region3
  $region8: #{efficientvit_forward.10} parent=0 // loop_exit
    _

// kernel: efficientvit_forward.11
$region0: #{efficientvit_forward.11}
  #allocation0 [shape = 'u32[]', space=smem, size = 0x4, offset = 0x4, fixed_abs, tag = 'smem constant byte address 0x4 - core index']
  #allocation1 [shape = 'u32[144,128]{1,0:T(1,128)}', space=vmem, size = 0x12000, scoped, tag = 'internal scratch']
  %s0 = inlined_call_operand.vmem [shape: bf16[8,112], index: 0, kind: input, shape index: {}]
  %s1 = inlined_call_operand.vmem [shape: bf16[112,16], index: 1, kind: input, shape index: {}]
  %s2 = inlined_call_operand.vmem [shape: f32[1,16], index: 2, kind: input, shape index: {}]
  %s3 = inlined_call_operand.vmem [shape: f32[8,16], index: 3, kind: output, shape index: {}]
  %s4 = sld [smem:[#allocation0]]
  $region22: #{efficientvit_forward.11} parent=0
    _
  %s6 = ssub.s32 1, %s4
  %s7 = scalar_select 0, %s6, %s4
  // Predicated region
  $region2: #{efficientvit_forward.11} parent=0 // pred_check
    _
  $region3: #{efficientvit_forward.11} parent=0 // pred_check_branch
    %9 = sbr.rel (0) target = $region5
  $region4: #{efficientvit_forward.11} parent=0 // pred_region
    _
  $region5: #{efficientvit_forward.11} parent=0 // pred_fallthru
    _
  // Predicated region
  $region6: #{efficientvit_forward.11} parent=0 // pred_check
    _
  $region7: #{efficientvit_forward.11} parent=0 // pred_check_branch
    %11 = sbr.rel (0) target = $region9
  $region8: #{efficientvit_forward.11} parent=0 // pred_region
    _
  $region9: #{efficientvit_forward.11} parent=0 // pred_fallthru
    _
  // Predicated region
  $region10: #{efficientvit_forward.11} parent=0 // pred_check
    _
  $region11: #{efficientvit_forward.11} parent=0 // pred_check_branch
    %13 = sbr.rel (0) target = $region13
  $region12: #{efficientvit_forward.11} parent=0 // pred_region
    _
  $region13: #{efficientvit_forward.11} parent=0 // pred_fallthru
    _
  %v15 = vld [vmem:[%s0] sm:$0xf]
  %v16 = vld [vmem:[%s1] sm:$0xf]
  %v17 = vld [vmem:[%s1 + $0x4] sm:$0xf]
  %v18 = vld [vmem:[%s1 + $0x8] sm:$0xf]
  %v19 = vld [vmem:[%s1 + $0xc] sm:$0xf]
  %v20 = vld [vmem:[%s1 + $0x10] sm:$0xf]
  %v21 = vld [vmem:[%s1 + $0x14] sm:$0xf]
  %v22 = vld [vmem:[%s1 + $0x18] sm:$0xf]
  %v23 = vld [vmem:[%s1 + $0x1c] sm:$0xf]
  %v24 = vld [vmem:[%s1 + $0x20] sm:$0xf]
  %v25 = vld [vmem:[%s1 + $0x24] sm:$0xf]
  %v26 = vld [vmem:[%s1 + $0x28] sm:$0xf]
  %v27 = vld [vmem:[%s1 + $0x2c] sm:$0xf]
  %v28 = vld [vmem:[%s1 + $0x30] sm:$0xf]
  %v29 = vld [vmem:[%s1 + $0x34] sm:$0xf]
  %v30 = vld [vmem:[%s2] sm:$0x1]
  %v32 = vlaneseq
  %v33 = vshrl.u32 %v32, 7
  %v34 = vsub.s32 0, %v33
  %v35 = vrot.slane %v30, %v34
  %v51 = vunpack.c.l.b16 %v16
  %v52 = vunpack.c.l.b16 %v17
  %v53 = vunpack.c.l.b16 %v18
  %v54 = vunpack.c.l.b16 %v19
  %v55 = vunpack.c.l.b16 %v20
  %v56 = vunpack.c.l.b16 %v21
  %v57 = vunpack.c.l.b16 %v22
  %v58 = vunpack.c.l.b16 %v23
  %v59 = vunpack.c.l.b16 %v24
  %v60 = vunpack.c.l.b16 %v25
  %v61 = vunpack.c.l.b16 %v26
  %v62 = vunpack.c.l.b16 %v27
  %v63 = vunpack.c.l.b16 %v28
  %v64 = vunpack.c.l.b16 %v29
  %v65 = vpack.c.b16 %v52, %v51
  %v66 = vpack.c.b16 %v54, %v53
  %v67 = vpack.c.b16 %v56, %v55
  %v68 = vpack.c.b16 %v58, %v57
  %v69 = vpack.c.b16 %v60, %v59
  %v70 = vpack.c.b16 %v62, %v61
  %v71 = vpack.c.b16 %v64, %v63
  %vm79 = vcmask 916480
  %v81 = vsel %vm79, %v15, 0
  %83 = vmatprep.subr.bf16.mxu0 0
  %84 = vmatpush1.bf16.msra.mxu0 0
  %85 = vmatprep.subr.bf16.mxu0 0
  %86 = vmatpush1.bf16.msra.mxu0 %v71
  %87 = vmatprep.subr.bf16.mxu0 0
  %88 = vmatpush1.bf16.msra.mxu0 %v70
  %89 = vmatprep.subr.bf16.mxu0 0
  %90 = vmatpush1.bf16.msra.mxu0 %v69
  %91 = vmatprep.subr.bf16.mxu0 0
  %92 = vmatpush1.bf16.msra.mxu0 %v68
  %93 = vmatprep.subr.bf16.mxu0 0
  %94 = vmatpush1.bf16.msra.mxu0 %v67
  %95 = vmatprep.subr.bf16.mxu0 0
  %96 = vmatpush1.bf16.msra.mxu0 %v66
  %97 = vmatprep.subr.bf16.mxu0 0
  %98 = vmatpush1.bf16.msra.mxu0 %v65
  %99 = vmatprep.subr.bf16.mxu0 0
  %100 = vmatpush2.bf16.msra.mxu0 0
  %101 = vmatprep.subr.bf16.mxu0 0
  %102 = vmatpush2.bf16.msra.mxu0 0
  %103 = vmatprep.subr.bf16.mxu0 0
  %104 = vmatpush2.bf16.msra.mxu0 0
  %105 = vmatprep.subr.bf16.mxu0 0
  %106 = vmatpush2.bf16.msra.mxu0 0
  %107 = vmatprep.subr.bf16.mxu0 0
  %108 = vmatpush2.bf16.msra.mxu0 0
  %109 = vmatprep.subr.bf16.mxu0 0
  %110 = vmatpush2.bf16.msra.mxu0 0
  %111 = vmatprep.subr.bf16.mxu0 0
  %112 = vmatpush2.bf16.msra.mxu0 0
  %113 = vmatprep.subr.bf16.mxu0 0
  %114 = vmatpush2.bf16.msra.mxu0 0
  %115 = vmatprep.mubr.bf16.mxu0 0
  %116 = vmatmul.mubr.bf16.gmra.mxu0 %v81
  %v117 = vpop.f32.mrf.mxu0
  %v118 = vadd.f32 %v35, %v117
  %v119 = vpop.f32.mrf.mxu0
  %v120 = vpop.f32.mrf.mxu0
  %v121 = vpop.f32.mrf.mxu0
  %122 = vdwg.mxu0
  %vm123 = vcmask 130048
  %124 = vst.msk [vmem:[%s3] sm:$0xff] %vm123, %v118
  // Predicated region
  $region14: #{efficientvit_forward.11} parent=0 // pred_check
    _
  $region15: #{efficientvit_forward.11} parent=0 // pred_check_branch
    %126 = sbr.rel (0) target = $region17
  $region16: #{efficientvit_forward.11} parent=0 // pred_region
    _
  $region17: #{efficientvit_forward.11} parent=0 // pred_fallthru
    _
  // Predicated region
  $region18: #{efficientvit_forward.11} parent=0 // pred_check
    _
  $region19: #{efficientvit_forward.11} parent=0 // pred_check_branch
    %128 = sbr.rel (0) target = $region21
  $region20: #{efficientvit_forward.11} parent=0 // pred_region
    _
  $region21: #{efficientvit_forward.11} parent=0 // pred_fallthru
    _

</llo_original>
